<compile_context>
chip_gen: v7x
topology: tpu7x:2x2x1
jax: 0.10.0
libtpu: 0.0.40
codegen_flags: <defaults>
</compile_context>

<pallas_src>
import functools

import jax
import jax.numpy as jnp
from jax.experimental import pallas as pl
from jax.experimental.pallas import tpu as pltpu

_EPS = 1e-5  # PyTorch BatchNorm2d default eps


# --------------------------------------------------------------------------- #
# Kernels
# --------------------------------------------------------------------------- #
def _conv1_stats_kernel(x_ref, w1_ref, b1_ref, stats_ref):
    """Phase 1: 1x1 grouped conv (block-diagonal dense) on one tile and the
    per-tile BN1 partial statistics (sum, sum of squares) per channel."""
    y = jnp.dot(w1_ref[...], x_ref[...],
                preferred_element_type=jnp.float32) + b1_ref[...]
    m_tile = y.shape[1]
    ones = jnp.ones((m_tile, 1), jnp.float32)
    # MXU dot-with-ones reductions keep the XLU free for the conv rolls.
    s = jnp.dot(y, ones, preferred_element_type=jnp.float32)        # (Cin, 1)
    q = jnp.dot(y * y, ones, preferred_element_type=jnp.float32)    # (Cin, 1)
    stats_ref[0, :, 0:1] = s
    stats_ref[0, :, 1:2] = q


def _conv3x3_stats_kernel(x_ref, w1_ref, b1_ref, sc1_ref, sh1_ref, rc_ref,
                          w3_ref, b3_ref, acc_ref, stats_ref, *, img_h, img_w):
    """Phase 2: recompute conv1 on the tile (bit-identical to phase 1), apply
    global BN1 + ReLU, run the 3x3 conv as 9 roll+mask+matmul accumulations,
    write the pre-BN2 activation tile and its BN2 partial statistics."""
    cin = w1_ref.shape[0]
    cout = w3_ref.shape[0]
    m = x_ref.shape[1]
    cd = w3_ref.dtype  # matmul-operand dtype (f32 or bf16)

    # 1x1 grouped conv + BN1 (precomputed global scale/shift) + ReLU.
    y = jnp.dot(w1_ref[...], x_ref[...],
                preferred_element_type=jnp.float32) + b1_ref[...]
    y = jnp.maximum(y * sc1_ref[...] + sh1_ref[...], 0.0).astype(cd)

    # Per-lane (row, col) of the output position -> boundary masks per tap.
    row = rc_ref[0:1, :]
    col = rc_ref[1:2, :]
    row_ok = {0: row >= 1.0, 1: None, 2: row < float(img_h - 1)}
    col_ok = {0: col >= 1.0, 1: None, 2: col < float(img_w - 1)}

    # 3x3 conv, padding=1: per-tap accumulation (no materialized im2col slab).
    acc = jnp.zeros((cout, m), jnp.float32)
    for i in range(3):
        for j in range(3):
            t = i * 3 + j
            delta = (i - 1) * img_w + (j - 1)      # flat-index tap offset
            tap = y if delta == 0 else pltpu.roll(y, (-delta) % m, axis=1)
            ok = row_ok[i]
            if col_ok[j] is not None:
                ok = col_ok[j] if ok is None else (ok & col_ok[j])
            if ok is not None:                     # center tap needs no mask
                tap = jnp.where(ok, tap, jnp.zeros((), cd))
            acc = acc + jnp.dot(w3_ref[:, t * cin:(t + 1) * cin], tap,
                                preferred_element_type=jnp.float32)
    acc = acc + b3_ref[...]
    acc_ref[...] = acc

    ones = jnp.ones((m, 1), jnp.float32)
    s = jnp.dot(acc, ones, preferred_element_type=jnp.float32)       # (Cout, 1)
    q = jnp.dot(acc * acc, ones, preferred_element_type=jnp.float32)
    stats_ref[0, :, 0:1] = s
    stats_ref[0, :, 1:2] = q


def _bn_relu_kernel(acc_ref, sc_ref, sh_ref, z_ref):
    """Phase 3: apply global BN2 (scale/shift) + ReLU, tile by tile."""
    z_ref[...] = jnp.maximum(acc_ref[...] * sc_ref[...] + sh_ref[...],
                             0.0).astype(z_ref.dtype)


# --------------------------------------------------------------------------- #
# Wrapper
# --------------------------------------------------------------------------- #
def _compiler_params(cin, cout, m_tile, itemsize):
    """Parallel grid axis (v7x megacore) + scoped-VMEM limit sized to the real
    working set (raised past the 16/32 MiB defaults, headroom under v7x's 64)."""
    tile_bytes = 2 * (cin * m_tile * itemsize + cout * m_tile * 4)   # dbl-buffered streams
    work_bytes = 3 * cin * m_tile * 4 + 2 * cout * m_tile * 4        # y, tap, acc copies
    weight_bytes = (cin * cin + 9 * cin * cout) * itemsize + (64 << 10)
    need = 2 * (tile_bytes + work_bytes) + weight_bytes
    limit = int(min(max(need, 16 << 20), 48 << 20))
    return pltpu.CompilerParams(dimension_semantics=("parallel",),
                                vmem_limit_bytes=limit)


def _finalize_bn(stats, m, gamma, beta):
    """Reduce per-tile (s, ssq) partials -> global batch-stat scale/shift (f32)."""
    s = jnp.sum(stats[:, :, 0], axis=0)
    q = jnp.sum(stats[:, :, 1], axis=0)
    mu = s / m
    var = jnp.maximum(q / m - mu * mu, 0.0)   # clamp E[x^2]-E[x]^2 cancellation
    rstd = jax.lax.rsqrt(var + _EPS)
    scale = gamma * rstd
    shift = beta - mu * scale
    return (scale.reshape(-1, 1).astype(jnp.float32),
            shift.reshape(-1, 1).astype(jnp.float32))


def shuffle_unit_forward(x_nchw, params, *, compute_dtype=jnp.float32,
                         images_per_tile=None):
    """x_nchw: (N, C, H, W) float32 with C == 2 * in_channels (as the PyTorch
    forward requires for branch1's first conv to be shape-consistent)."""
    w1_full, b1, g1, be1, w3_mat, b3, g2, be2 = params
    n, c, h, w = x_nchw.shape
    cin = w1_full.shape[0]
    cout = w3_mat.shape[0]
    assert c == 2 * cin, "forward() slices x into two halves of in_channels"
    m = n * h * w

    if images_per_tile is None:
        # Tiles must hold whole images (roll+mask invariant); prefer tiles whose
        # lane width is a multiple of 128.
        images_per_tile = 1 if (h * w) % 128 == 0 else n
        # TODO(synk): pad the flattened spatial axis to a multiple of 128 for
        #             spatial sizes where H*W % 128 != 0 instead of one big tile.
    assert n % images_per_tile == 0
    ntiles = n // images_per_tile
    m_tile = images_per_tile * h * w

    # NCHW -> channels-first flat (Cin, N*H*W) for the branch1 half only.  In a
    # full ShuffleNet this layout would be carried across units.
    x1 = jnp.transpose(x_nchw[:, :cin], (1, 0, 2, 3)).reshape(cin, m)
    x1 = x1.astype(compute_dtype)                  # bf16 stream halves input DMA
    w1_cd = w1_full.astype(compute_dtype)
    w3_cd = w3_mat.astype(compute_dtype)
    b1_col = b1.reshape(-1, 1).astype(jnp.float32)
    b3_col = b3.reshape(-1, 1).astype(jnp.float32)

    # Per-lane (row, col) for one tile (identical for every tile since tiles
    # hold whole images) -> in-kernel boundary masks from two compares per tap.
    idx = jnp.arange(m_tile, dtype=jnp.int32)
    rc = jnp.stack([((idx // w) % h).astype(jnp.float32),
                    (idx % w).astype(jnp.float32)], axis=0)          # (2, m_tile)

    cparams = _compiler_params(cin, cout, m_tile, jnp.dtype(compute_dtype).itemsize)

    # ---- Phase 1: conv1 + BN1 partial stats (per tile) ----
    stats1 = pl.pallas_call(
        _conv1_stats_kernel,
        out_shape=jax.ShapeDtypeStruct((ntiles, cin, 2), jnp.float32),
        grid=(ntiles,),
        in_specs=[
            pl.BlockSpec((cin, m_tile), lambda b: (0, b)),
            pl.BlockSpec((cin, cin), lambda b: (0, 0)),
            pl.BlockSpec((cin, 1), lambda b: (0, 0)),
        ],
        out_specs=pl.BlockSpec((1, cin, 2), lambda b: (b, 0, 0)),
        compiler_params=cparams,
    )(x1, w1_cd, b1_col)
    scale1, shift1 = _finalize_bn(stats1, m, g1, be1)

    # ---- Phase 2: BN1 apply + 3x3 conv (per-tap accumulation) + BN2 stats ----
    acc, stats2 = pl.pallas_call(
        functools.partial(_conv3x3_stats_kernel, img_h=h, img_w=w),
        out_shape=(jax.ShapeDtypeStruct((cout, m), jnp.float32),
                   jax.ShapeDtypeStruct((ntiles, cout, 2), jnp.float32)),
        grid=(ntiles,),
        in_specs=[
            pl.BlockSpec((cin, m_tile), lambda b: (0, b)),
            pl.BlockSpec((cin, cin), lambda b: (0, 0)),
            pl.BlockSpec((cin, 1), lambda b: (0, 0)),
            pl.BlockSpec((cin, 1), lambda b: (0, 0)),
            pl.BlockSpec((cin, 1), lambda b: (0, 0)),
            pl.BlockSpec((2, m_tile), lambda b: (0, 0)),
            pl.BlockSpec((cout, 9 * cin), lambda b: (0, 0)),
            pl.BlockSpec((cout, 1), lambda b: (0, 0)),
        ],
        out_specs=(pl.BlockSpec((cout, m_tile), lambda b: (0, b)),
                   pl.BlockSpec((1, cout, 2), lambda b: (b, 0, 0))),
        compiler_params=cparams,
    )(x1, w1_cd, b1_col, scale1, shift1, rc, w3_cd, b3_col)
    scale2, shift2 = _finalize_bn(stats2, m, g2, be2)

    # ---- Phase 3: BN2 apply + ReLU (per tile) ----
    z = pl.pallas_call(
        _bn_relu_kernel,
        out_shape=jax.ShapeDtypeStruct((cout, m), jnp.float32),
        grid=(ntiles,),
        in_specs=[
            pl.BlockSpec((cout, m_tile), lambda b: (0, b)),
            pl.BlockSpec((cout, 1), lambda b: (0, 0)),
            pl.BlockSpec((cout, 1), lambda b: (0, 0)),
        ],
        out_specs=pl.BlockSpec((cout, m_tile), lambda b: (0, b)),
        compiler_params=cparams,
    )(acc, scale2, shift2)

    z_nchw = jnp.transpose(z.reshape(cout, n, h, w), (1, 0, 2, 3))
    # torch.cat([branch1(x1), x2], dim=1): x2 never enters compute VMEM.
    return jnp.concatenate([z_nchw, x_nchw[:, cin:]], axis=1)


# --------------------------------------------------------------------------- #
# Parameters & pure-JAX reference (verification only)
# --------------------------------------------------------------------------- #
def init_params(key, in_channels, out_channels, groups):
    """Deterministic synthetic parameters matching the PyTorch module shapes."""
    ks = jax.random.split(key, 10)
    cpg = in_channels // groups   # in-channels per group (conv1 maps in -> in)

    # branch1[0]: Conv2d(in, in, 1, groups=g): weight (in, in//g, 1, 1), bias (in,)
    w1 = jax.random.normal(ks[0], (in_channels, cpg, 1, 1), jnp.float32) * 0.2
    b1 = jax.random.normal(ks[1], (in_channels,), jnp.float32) * 0.1
    # Grouped 1x1 conv as block-diagonal dense (Cout, Cin).  Dense is the right
    # call at small Cin/groups; TODO(synk): per-group pl.ds dots when Cin/g >= 64.
    w1_full = jnp.zeros((in_channels, in_channels), jnp.float32)
    for gi in range(groups):
        blk = w1[gi * cpg:(gi + 1) * cpg, :, 0, 0]
        w1_full = w1_full.at[gi * cpg:(gi + 1) * cpg,
                             gi * cpg:(gi + 1) * cpg].set(blk)

    # branch1[1]: BatchNorm2d(in_channels)
    g1 = 1.0 + 0.1 * jax.random.normal(ks[2], (in_channels,), jnp.float32)
    be1 = 0.1 * jax.random.normal(ks[3], (in_channels,), jnp.float32)

    # branch1[3]: Conv2d(in, out, 3, padding=1): weight (out, in, 3, 3), bias (out,)
    w3 = jax.random.normal(ks[4], (out_channels, in_channels, 3, 3), jnp.float32) * 0.1
    b3 = jax.random.normal(ks[5], (out_channels,), jnp.float32) * 0.1
    # (out, in, 3, 3) -> (out, 9*in), column index t*Cin + c with t = i*3 + j,
    # matching the per-tap slices taken inside the kernel.
    w3_mat = jnp.transpose(w3, (0, 2, 3, 1)).reshape(out_channels, 9 * in_channels)

    # branch1[4]: BatchNorm2d(out_channels)
    g2 = 1.0 + 0.1 * jax.random.normal(ks[6], (out_channels,), jnp.float32)
    be2 = 0.1 * jax.random.normal(ks[7], (out_channels,), jnp.float32)

    # branch2: declared in the PyTorch module but never used by forward();
    # drawn here only for shape/RNG parity.
    _ = jax.random.normal(ks[8], (out_channels, cpg, 1, 1), jnp.float32)
    _ = jax.random.normal(ks[9], (out_channels,), jnp.float32)

    return (w1_full, b1, g1, be1, w3_mat, b3, g2, be2)


def reference_forward(x_nchw, params):
    """Pure-JAX NHWC reference mirroring the PyTorch forward (verification only)."""
    P = jax.lax.Precision.HIGHEST
    w1_full, b1, g1, be1, w3_mat, b3, g2, be2 = params
    n, c, h, w = x_nchw.shape
    cin = c // 2
    cout = w3_mat.shape[0]
    x = jnp.transpose(x_nchw, (0, 2, 3, 1))
    x1, x2 = x[..., :cin], x[..., cin:]

    y = jnp.einsum('nhwc,oc->nhwo', x1, w1_full, precision=P) + b1
    mu = jnp.mean(y, axis=(0, 1, 2), keepdims=True)
    var = jnp.mean((y - mu) ** 2, axis=(0, 1, 2), keepdims=True)
    y = jnp.maximum((y - mu) * jax.lax.rsqrt(var + _EPS) * g1 + be1, 0.0)

    yp = jnp.pad(y, ((0, 0), (1, 1), (1, 1), (0, 0)))
    w3_taps = w3_mat.reshape(cout, 9, cin)
    acc = jnp.zeros((n, h, w, cout), jnp.float32) + b3
    for i in range(3):
        for j in range(3):
            acc = acc + jnp.einsum('nhwc,oc->nhwo',
                                   yp[:, i:i + h, j:j + w, :],
                                   w3_taps[:, i * 3 + j, :], precision=P)
    mu2 = jnp.mean(acc, axis=(0, 1, 2), keepdims=True)
    var2 = jnp.mean((acc - mu2) ** 2, axis=(0, 1, 2), keepdims=True)
    z = jnp.maximum((acc - mu2) * jax.lax.rsqrt(var2 + _EPS) * g2 + be2, 0.0)

    out = jnp.concatenate([z, x2], axis=-1)
    return jnp.transpose(out, (0, 3, 1, 2))


# --------------------------------------------------------------------------- #
# Demo / self-check
# --------------------------------------------------------------------------- #
if __name__ == "__main__":
    in_channels, out_channels, groups = 4, 8, 2
    n, h, w = 2, 16, 16
    c = 2 * in_channels  # forward() slices x into halves of `in_channels` each

    key = jax.random.PRNGKey(0)
    kx, kp = jax.random.split(key)
    x = jax.random.normal(kx, (n, c, h, w), jnp.float32)
    params = init_params(kp, in_channels, out_channels, groups)

    ref = reference_forward(x, params)

    fwd = jax.jit(shuffle_unit_forward,
                  static_argnames=("compute_dtype", "images_per_tile"))

    # f32 matmul-operand path: correctness check against the f32 reference.
    out_f32 = jax.block_until_ready(fwd(x, params, compute_dtype=jnp.float32))
    assert out_f32.shape == (n, out_channels + in_channels, h, w), out_f32.shape
    err = float(jnp.max(jnp.abs(out_f32 - ref)))
    assert err < 1e-2, f"f32 path max abs err {err}"

    # bf16 matmul-operand path (production default for the v5e/v6e/v7x MXU):
    # f32 accumulation + f32 BN stats, so only bf16-level quantization remains.
    out_bf16 = jax.block_until_ready(fwd(x, params, compute_dtype=jnp.bfloat16))
    err_bf = float(jnp.max(jnp.abs(out_bf16 - ref)))
    assert bool(jnp.all(jnp.isfinite(out_bf16))) and err_bf < 0.3, err_bf

    print("KERNEL_OK")
</pallas_src>

<mosaic_0001>
module attributes {stable_mosaic.version = 11 : i64} {
  func.func @_conv1_stats_kernel(%arg0: i32, %arg1: memref<4x256xf32, #tpu.memory_space<vmem>>, %arg2: memref<4x4xf32, #tpu.memory_space<vmem>>, %arg3: memref<4x1xf32, #tpu.memory_space<vmem>>, %arg4: memref<1x4x2xf32, #tpu.memory_space<vmem>>) attributes {dimension_semantics = [#tpu.dimension_semantics<parallel>], iteration_bounds = array<i64: 2>, scalar_prefetch = 0 : i64, scratch_operands = 0 : i64, tpu.core_type = #tpu.core_type<tc>, window_params = [{transform_indices = @transform_0, window_bounds = array<i64: 4, 256>}, {pipeline_mode = #tpu.pipeline_mode<synchronous>, transform_indices = @transform_1, window_bounds = array<i64: 4, 4>}, {pipeline_mode = #tpu.pipeline_mode<synchronous>, transform_indices = @transform_2, window_bounds = array<i64: 4, 1>}, {transform_indices = @transform_3, window_bounds = array<i64: 1, 4, 2>}]} {
    %c0 = arith.constant 0 : index
    %c0_0 = arith.constant 0 : index
    %0 = vector.load %arg2[%c0, %c0_0] : memref<4x4xf32, #tpu.memory_space<vmem>>, vector<4x4xf32>
    %c0_1 = arith.constant 0 : index
    %c0_2 = arith.constant 0 : index
    %1 = vector.load %arg1[%c0_1, %c0_2] : memref<4x256xf32, #tpu.memory_space<vmem>>, vector<4x256xf32>
    %cst = arith.constant dense<0.000000e+00> : vector<4x256xf32>
    %2 = tpu.matmul %0, %1, %cst {dimension_numbers = #tpu.dot_dimension_numbers<[1], [0], [0], [1], [0, 0, 1, 1], [], []>} : vector<4x4xf32>, vector<4x256xf32>, vector<4x256xf32> -> vector<4x256xf32>
    %c0_3 = arith.constant 0 : index
    %c0_4 = arith.constant 0 : index
    %3 = vector.load %arg3[%c0_3, %c0_4] : memref<4x1xf32, #tpu.memory_space<vmem>>, vector<4x1xf32>
    %4 = vector.broadcast %3 : vector<4x1xf32> to vector<4x256xf32>
    %5 = arith.addf %2, %4 : vector<4x256xf32>
    %cst_5 = arith.constant 1.000000e+00 : f32
    %6 = vector.broadcast %cst_5 : f32 to vector<256x1xf32>
    %cst_6 = arith.constant dense<0.000000e+00> : vector<4x1xf32>
    %7 = tpu.matmul %5, %6, %cst_6 {dimension_numbers = #tpu.dot_dimension_numbers<[1], [0], [0], [1], [0, 0, 1, 1], [], []>} : vector<4x256xf32>, vector<256x1xf32>, vector<4x1xf32> -> vector<4x1xf32>
    %8 = arith.mulf %5, %5 : vector<4x256xf32>
    %cst_7 = arith.constant dense<0.000000e+00> : vector<4x1xf32>
    %9 = tpu.matmul %8, %6, %cst_7 {dimension_numbers = #tpu.dot_dimension_numbers<[1], [0], [0], [1], [0, 0, 1, 1], [], []>} : vector<4x256xf32>, vector<256x1xf32>, vector<4x1xf32> -> vector<4x1xf32>
    %c0_8 = arith.constant 0 : index
    %c0_9 = arith.constant 0 : index
    %c0_10 = arith.constant 0 : index
    %10 = vector.load %arg4[%c0_8, %c0_9, %c0_10] : memref<1x4x2xf32, #tpu.memory_space<vmem>>, vector<1x4x1xf32>
    %11 = vector.shape_cast %10 : vector<1x4x1xf32> to vector<4x1xf32>
    %12 = vector.shape_cast %7 : vector<4x1xf32> to vector<1x4x1xf32>
    tpu.vector_store %arg4[%c0_8, %c0_9, %c0_10], %12 {strides = array<i32>} : memref<1x4x2xf32, #tpu.memory_space<vmem>>, vector<1x4x1xf32>,
    %c0_11 = arith.constant 0 : index
    %c0_12 = arith.constant 0 : index
    %c1 = arith.constant 1 : index
    %13 = vector.load %arg4[%c0_11, %c0_12, %c1] : memref<1x4x2xf32, #tpu.memory_space<vmem>>, vector<1x4x1xf32>
    %14 = vector.shape_cast %13 : vector<1x4x1xf32> to vector<4x1xf32>
    %15 = vector.shape_cast %9 : vector<4x1xf32> to vector<1x4x1xf32>
    tpu.vector_store %arg4[%c0_11, %c0_12, %c1], %15 {strides = array<i32>} : memref<1x4x2xf32, #tpu.memory_space<vmem>>, vector<1x4x1xf32>,
    return
  }
  func.func @transform_0(%arg0: i32) -> (i32, i32) {
    %c0_i32 = arith.constant 0 : i32
    %c0_i32_0 = arith.constant 0 : i32
    return %c0_i32, %arg0 : i32, i32
  }
  func.func @transform_1(%arg0: i32) -> (i32, i32) {
    %c0_i32 = arith.constant 0 : i32
    %c0_i32_0 = arith.constant 0 : i32
    %c0_i32_1 = arith.constant 0 : i32
    return %c0_i32, %c0_i32_0 : i32, i32
  }
  func.func @transform_2(%arg0: i32) -> (i32, i32) {
    %c0_i32 = arith.constant 0 : i32
    %c0_i32_0 = arith.constant 0 : i32
    %c0_i32_1 = arith.constant 0 : i32
    return %c0_i32, %c0_i32_0 : i32, i32
  }
  func.func @transform_3(%arg0: i32) -> (i32, i32, i32) {
    %c0_i32 = arith.constant 0 : i32
    %c0_i32_0 = arith.constant 0 : i32
    %c0_i32_1 = arith.constant 0 : i32
    return %arg0, %c0_i32, %c0_i32_0 : i32, i32, i32
  }
}

module attributes {stable_mosaic.version = 11 : i64} {
  func.func @_conv3x3_stats_kernel(%arg0: i32, %arg1: memref<4x256xf32, #tpu.memory_space<vmem>>, %arg2: memref<4x4xf32, #tpu.memory_space<vmem>>, %arg3: memref<4x1xf32, #tpu.memory_space<vmem>>, %arg4: memref<4x1xf32, #tpu.memory_space<vmem>>, %arg5: memref<4x1xf32, #tpu.memory_space<vmem>>, %arg6: memref<2x256xf32, #tpu.memory_space<vmem>>, %arg7: memref<8x36xf32, #tpu.memory_space<vmem>>, %arg8: memref<8x1xf32, #tpu.memory_space<vmem>>, %arg9: memref<8x256xf32, #tpu.memory_space<vmem>>, %arg10: memref<1x8x2xf32, #tpu.memory_space<vmem>>) attributes {dimension_semantics = [#tpu.dimension_semantics<parallel>], iteration_bounds = array<i64: 2>, scalar_prefetch = 0 : i64, scratch_operands = 0 : i64, tpu.core_type = #tpu.core_type<tc>, window_params = [{transform_indices = @transform_0, window_bounds = array<i64: 4, 256>}, {pipeline_mode = #tpu.pipeline_mode<synchronous>, transform_indices = @transform_1, window_bounds = array<i64: 4, 4>}, {pipeline_mode = #tpu.pipeline_mode<synchronous>, transform_indices = @transform_2, window_bounds = array<i64: 4, 1>}, {pipeline_mode = #tpu.pipeline_mode<synchronous>, transform_indices = @transform_3, window_bounds = array<i64: 4, 1>}, {pipeline_mode = #tpu.pipeline_mode<synchronous>, transform_indices = @transform_4, window_bounds = array<i64: 4, 1>}, {pipeline_mode = #tpu.pipeline_mode<synchronous>, transform_indices = @transform_5, window_bounds = array<i64: 2, 256>}, {pipeline_mode = #tpu.pipeline_mode<synchronous>, transform_indices = @transform_6, window_bounds = array<i64: 8, 36>}, {pipeline_mode = #tpu.pipeline_mode<synchronous>, transform_indices = @transform_7, window_bounds = array<i64: 8, 1>}, {transform_indices = @transform_8, window_bounds = array<i64: 8, 256>}, {transform_indices = @transform_9, window_bounds = array<i64: 1, 8, 2>}]} {
    %c0 = arith.constant 0 : index
    %c0_0 = arith.constant 0 : index
    %0 = vector.load %arg2[%c0, %c0_0] : memref<4x4xf32, #tpu.memory_space<vmem>>, vector<4x4xf32>
    %c0_1 = arith.constant 0 : index
    %c0_2 = arith.constant 0 : index
    %1 = vector.load %arg1[%c0_1, %c0_2] : memref<4x256xf32, #tpu.memory_space<vmem>>, vector<4x256xf32>
    %cst = arith.constant dense<0.000000e+00> : vector<4x256xf32>
    %2 = tpu.matmul %0, %1, %cst {dimension_numbers = #tpu.dot_dimension_numbers<[1], [0], [0], [1], [0, 0, 1, 1], [], []>} : vector<4x4xf32>, vector<4x256xf32>, vector<4x256xf32> -> vector<4x256xf32>
    %c0_3 = arith.constant 0 : index
    %c0_4 = arith.constant 0 : index
    %3 = vector.load %arg3[%c0_3, %c0_4] : memref<4x1xf32, #tpu.memory_space<vmem>>, vector<4x1xf32>
    %4 = vector.broadcast %3 : vector<4x1xf32> to vector<4x256xf32>
    %5 = arith.addf %2, %4 : vector<4x256xf32>
    %c0_5 = arith.constant 0 : index
    %c0_6 = arith.constant 0 : index
    %6 = vector.load %arg4[%c0_5, %c0_6] : memref<4x1xf32, #tpu.memory_space<vmem>>, vector<4x1xf32>
    %7 = vector.broadcast %6 : vector<4x1xf32> to vector<4x256xf32>
    %8 = arith.mulf %5, %7 : vector<4x256xf32>
    %c0_7 = arith.constant 0 : index
    %c0_8 = arith.constant 0 : index
    %9 = vector.load %arg5[%c0_7, %c0_8] : memref<4x1xf32, #tpu.memory_space<vmem>>, vector<4x1xf32>
    %10 = vector.broadcast %9 : vector<4x1xf32> to vector<4x256xf32>
    %11 = arith.addf %8, %10 : vector<4x256xf32>
    %cst_9 = arith.constant 0.000000e+00 : f32
    %12 = vector.broadcast %cst_9 : f32 to vector<4x256xf32>
    %13 = arith.maximumf %11, %12 : vector<4x256xf32>
    %c0_10 = arith.constant 0 : index
    %c0_11 = arith.constant 0 : index
    %14 = vector.load %arg6[%c0_10, %c0_11] : memref<2x256xf32, #tpu.memory_space<vmem>>, vector<1x256xf32>
    %c1 = arith.constant 1 : index
    %c0_12 = arith.constant 0 : index
    %15 = vector.load %arg6[%c1, %c0_12] : memref<2x256xf32, #tpu.memory_space<vmem>>, vector<1x256xf32>
    %cst_13 = arith.constant 1.000000e+00 : f32
    %16 = vector.broadcast %cst_13 : f32 to vector<1x256xf32>
    %17 = arith.cmpf oge, %14, %16 : vector<1x256xf32>
    %cst_14 = arith.constant 1.500000e+01 : f32
    %18 = vector.broadcast %cst_14 : f32 to vector<1x256xf32>
    %19 = arith.cmpf olt, %14, %18 : vector<1x256xf32>
    %cst_15 = arith.constant 1.000000e+00 : f32
    %20 = vector.broadcast %cst_15 : f32 to vector<1x256xf32>
    %21 = arith.cmpf oge, %15, %20 : vector<1x256xf32>
    %cst_16 = arith.constant 1.500000e+01 : f32
    %22 = vector.broadcast %cst_16 : f32 to vector<1x256xf32>
    %23 = arith.cmpf olt, %15, %22 : vector<1x256xf32>
    %cst_17 = arith.constant 0.000000e+00 : f32
    %24 = vector.broadcast %cst_17 : f32 to vector<8x256xf32>
    %c17_i32 = arith.constant 17 : i32
    %25 = tpu.dynamic_rotate %13 by %c17_i32 dim 1 : vector<4x256xf32>, i32 -> vector<4x256xf32>
    %26 = arith.andi %17, %21 : vector<1x256xi1>
    %cst_18 = arith.constant 0.000000e+00 : f32
    %27 = vector.shape_cast %26 : vector<1x256xi1> to vector<1x256xi1>
    %28 = vector.broadcast %27 : vector<1x256xi1> to vector<4x256xi1>
    %29 = vector.broadcast %cst_18 : f32 to vector<4x256xf32>
    %30 = arith.select %28, %25, %29 : vector<4x256xi1>, vector<4x256xf32>
    %c0_19 = arith.constant 0 : index
    %c0_20 = arith.constant 0 : index
    %31 = vector.load %arg7[%c0_19, %c0_20] : memref<8x36xf32, #tpu.memory_space<vmem>>, vector<8x4xf32>
    %cst_21 = arith.constant dense<0.000000e+00> : vector<8x256xf32>
    %32 = tpu.matmul %31, %30, %cst_21 {dimension_numbers = #tpu.dot_dimension_numbers<[1], [0], [0], [1], [0, 0, 1, 1], [], []>} : vector<8x4xf32>, vector<4x256xf32>, vector<8x256xf32> -> vector<8x256xf32>
    %33 = arith.addf %24, %32 : vector<8x256xf32>
    %c16_i32 = arith.constant 16 : i32
    %34 = tpu.dynamic_rotate %13 by %c16_i32 dim 1 : vector<4x256xf32>, i32 -> vector<4x256xf32>
    %cst_22 = arith.constant 0.000000e+00 : f32
    %35 = vector.shape_cast %17 : vector<1x256xi1> to vector<1x256xi1>
    %36 = vector.broadcast %35 : vector<1x256xi1> to vector<4x256xi1>
    %37 = vector.broadcast %cst_22 : f32 to vector<4x256xf32>
    %38 = arith.select %36, %34, %37 : vector<4x256xi1>, vector<4x256xf32>
    %c0_23 = arith.constant 0 : index
    %c4 = arith.constant 4 : index
    %39 = vector.load %arg7[%c0_23, %c4] : memref<8x36xf32, #tpu.memory_space<vmem>>, vector<8x4xf32>
    %cst_24 = arith.constant dense<0.000000e+00> : vector<8x256xf32>
    %40 = tpu.matmul %39, %38, %cst_24 {dimension_numbers = #tpu.dot_dimension_numbers<[1], [0], [0], [1], [0, 0, 1, 1], [], []>} : vector<8x4xf32>, vector<4x256xf32>, vector<8x256xf32> -> vector<8x256xf32>
    %41 = arith.addf %33, %40 : vector<8x256xf32>
    %c15_i32 = arith.constant 15 : i32
    %42 = tpu.dynamic_rotate %13 by %c15_i32 dim 1 : vector<4x256xf32>, i32 -> vector<4x256xf32>
    %43 = arith.andi %17, %23 : vector<1x256xi1>
    %cst_25 = arith.constant 0.000000e+00 : f32
    %44 = vector.shape_cast %43 : vector<1x256xi1> to vector<1x256xi1>
    %45 = vector.broadcast %44 : vector<1x256xi1> to vector<4x256xi1>
    %46 = vector.broadcast %cst_25 : f32 to vector<4x256xf32>
    %47 = arith.select %45, %42, %46 : vector<4x256xi1>, vector<4x256xf32>
    %c0_26 = arith.constant 0 : index
    %c8 = arith.constant 8 : index
    %48 = vector.load %arg7[%c0_26, %c8] : memref<8x36xf32, #tpu.memory_space<vmem>>, vector<8x4xf32>
    %cst_27 = arith.constant dense<0.000000e+00> : vector<8x256xf32>
    %49 = tpu.matmul %48, %47, %cst_27 {dimension_numbers = #tpu.dot_dimension_numbers<[1], [0], [0], [1], [0, 0, 1, 1], [], []>} : vector<8x4xf32>, vector<4x256xf32>, vector<8x256xf32> -> vector<8x256xf32>
    %50 = arith.addf %41, %49 : vector<8x256xf32>
    %c1_i32 = arith.constant 1 : i32
    %51 = tpu.dynamic_rotate %13 by %c1_i32 dim 1 : vector<4x256xf32>, i32 -> vector<4x256xf32>
    %cst_28 = arith.constant 0.000000e+00 : f32
    %52 = vector.shape_cast %21 : vector<1x256xi1> to vector<1x256xi1>
    %53 = vector.broadcast %52 : vector<1x256xi1> to vector<4x256xi1>
    %54 = vector.broadcast %cst_28 : f32 to vector<4x256xf32>
    %55 = arith.select %53, %51, %54 : vector<4x256xi1>, vector<4x256xf32>
    %c0_29 = arith.constant 0 : index
    %c12 = arith.constant 12 : index
    %56 = vector.load %arg7[%c0_29, %c12] : memref<8x36xf32, #tpu.memory_space<vmem>>, vector<8x4xf32>
    %cst_30 = arith.constant dense<0.000000e+00> : vector<8x256xf32>
    %57 = tpu.matmul %56, %55, %cst_30 {dimension_numbers = #tpu.dot_dimension_numbers<[1], [0], [0], [1], [0, 0, 1, 1], [], []>} : vector<8x4xf32>, vector<4x256xf32>, vector<8x256xf32> -> vector<8x256xf32>
    %58 = arith.addf %50, %57 : vector<8x256xf32>
    %c0_31 = arith.constant 0 : index
    %c16 = arith.constant 16 : index
    %59 = vector.load %arg7[%c0_31, %c16] : memref<8x36xf32, #tpu.memory_space<vmem>>, vector<8x4xf32>
    %cst_32 = arith.constant dense<0.000000e+00> : vector<8x256xf32>
    %60 = tpu.matmul %59, %13, %cst_32 {dimension_numbers = #tpu.dot_dimension_numbers<[1], [0], [0], [1], [0, 0, 1, 1], [], []>} : vector<8x4xf32>, vector<4x256xf32>, vector<8x256xf32> -> vector<8x256xf32>
    %61 = arith.addf %58, %60 : vector<8x256xf32>
    %c255_i32 = arith.constant 255 : i32
    %62 = tpu.dynamic_rotate %13 by %c255_i32 dim 1 : vector<4x256xf32>, i32 -> vector<4x256xf32>
    %cst_33 = arith.constant 0.000000e+00 : f32
    %63 = vector.shape_cast %23 : vector<1x256xi1> to vector<1x256xi1>
    %64 = vector.broadcast %63 : vector<1x256xi1> to vector<4x256xi1>
    %65 = vector.broadcast %cst_33 : f32 to vector<4x256xf32>
    %66 = arith.select %64, %62, %65 : vector<4x256xi1>, vector<4x256xf32>
    %c0_34 = arith.constant 0 : index
    %c20 = arith.constant 20 : index
    %67 = vector.load %arg7[%c0_34, %c20] : memref<8x36xf32, #tpu.memory_space<vmem>>, vector<8x4xf32>
    %cst_35 = arith.constant dense<0.000000e+00> : vector<8x256xf32>
    %68 = tpu.matmul %67, %66, %cst_35 {dimension_numbers = #tpu.dot_dimension_numbers<[1], [0], [0], [1], [0, 0, 1, 1], [], []>} : vector<8x4xf32>, vector<4x256xf32>, vector<8x256xf32> -> vector<8x256xf32>
    %69 = arith.addf %61, %68 : vector<8x256xf32>
    %c241_i32 = arith.constant 241 : i32
    %70 = tpu.dynamic_rotate %13 by %c241_i32 dim 1 : vector<4x256xf32>, i32 -> vector<4x256xf32>
    %71 = arith.andi %19, %21 : vector<1x256xi1>
    %cst_36 = arith.constant 0.000000e+00 : f32
    %72 = vector.shape_cast %71 : vector<1x256xi1> to vector<1x256xi1>
    %73 = vector.broadcast %72 : vector<1x256xi1> to vector<4x256xi1>
    %74 = vector.broadcast %cst_36 : f32 to vector<4x256xf32>
    %75 = arith.select %73, %70, %74 : vector<4x256xi1>, vector<4x256xf32>
    %c0_37 = arith.constant 0 : index
    %c24 = arith.constant 24 : index
    %76 = vector.load %arg7[%c0_37, %c24] : memref<8x36xf32, #tpu.memory_space<vmem>>, vector<8x4xf32>
    %cst_38 = arith.constant dense<0.000000e+00> : vector<8x256xf32>
    %77 = tpu.matmul %76, %75, %cst_38 {dimension_numbers = #tpu.dot_dimension_numbers<[1], [0], [0], [1], [0, 0, 1, 1], [], []>} : vector<8x4xf32>, vector<4x256xf32>, vector<8x256xf32> -> vector<8x256xf32>
    %78 = arith.addf %69, %77 : vector<8x256xf32>
    %c240_i32 = arith.constant 240 : i32
    %79 = tpu.dynamic_rotate %13 by %c240_i32 dim 1 : vector<4x256xf32>, i32 -> vector<4x256xf32>
    %cst_39 = arith.constant 0.000000e+00 : f32
    %80 = vector.shape_cast %19 : vector<1x256xi1> to vector<1x256xi1>
    %81 = vector.broadcast %80 : vector<1x256xi1> to vector<4x256xi1>
    %82 = vector.broadcast %cst_39 : f32 to vector<4x256xf32>
    %83 = arith.select %81, %79, %82 : vector<4x256xi1>, vector<4x256xf32>
    %c0_40 = arith.constant 0 : index
    %c28 = arith.constant 28 : index
    %84 = vector.load %arg7[%c0_40, %c28] : memref<8x36xf32, #tpu.memory_space<vmem>>, vector<8x4xf32>
    %cst_41 = arith.constant dense<0.000000e+00> : vector<8x256xf32>
    %85 = tpu.matmul %84, %83, %cst_41 {dimension_numbers = #tpu.dot_dimension_numbers<[1], [0], [0], [1], [0, 0, 1, 1], [], []>} : vector<8x4xf32>, vector<4x256xf32>, vector<8x256xf32> -> vector<8x256xf32>
    %86 = arith.addf %78, %85 : vector<8x256xf32>
    %c239_i32 = arith.constant 239 : i32
    %87 = tpu.dynamic_rotate %13 by %c239_i32 dim 1 : vector<4x256xf32>, i32 -> vector<4x256xf32>
    %88 = arith.andi %19, %23 : vector<1x256xi1>
    %cst_42 = arith.constant 0.000000e+00 : f32
    %89 = vector.shape_cast %88 : vector<1x256xi1> to vector<1x256xi1>
    %90 = vector.broadcast %89 : vector<1x256xi1> to vector<4x256xi1>
    %91 = vector.broadcast %cst_42 : f32 to vector<4x256xf32>
    %92 = arith.select %90, %87, %91 : vector<4x256xi1>, vector<4x256xf32>
    %c0_43 = arith.constant 0 : index
    %c32 = arith.constant 32 : index
    %93 = vector.load %arg7[%c0_43, %c32] : memref<8x36xf32, #tpu.memory_space<vmem>>, vector<8x4xf32>
    %cst_44 = arith.constant dense<0.000000e+00> : vector<8x256xf32>
    %94 = tpu.matmul %93, %92, %cst_44 {dimension_numbers = #tpu.dot_dimension_numbers<[1], [0], [0], [1], [0, 0, 1, 1], [], []>} : vector<8x4xf32>, vector<4x256xf32>, vector<8x256xf32> -> vector<8x256xf32>
    %95 = arith.addf %86, %94 : vector<8x256xf32>
    %c0_45 = arith.constant 0 : index
    %c0_46 = arith.constant 0 : index
    %96 = vector.load %arg8[%c0_45, %c0_46] : memref<8x1xf32, #tpu.memory_space<vmem>>, vector<8x1xf32>
    %97 = vector.broadcast %96 : vector<8x1xf32> to vector<8x256xf32>
    %98 = arith.addf %95, %97 : vector<8x256xf32>
    %c0_47 = arith.constant 0 : index
    %c0_48 = arith.constant 0 : index
    %99 = vector.load %arg9[%c0_47, %c0_48] : memref<8x256xf32, #tpu.memory_space<vmem>>, vector<8x256xf32>
    tpu.vector_store %arg9[%c0_47, %c0_48], %98 {strides = array<i32>} : memref<8x256xf32, #tpu.memory_space<vmem>>, vector<8x256xf32>,
    %cst_49 = arith.constant 1.000000e+00 : f32
    %100 = vector.broadcast %cst_49 : f32 to vector<256x1xf32>
    %cst_50 = arith.constant dense<0.000000e+00> : vector<8x1xf32>
    %101 = tpu.matmul %98, %100, %cst_50 {dimension_numbers = #tpu.dot_dimension_numbers<[1], [0], [0], [1], [0, 0, 1, 1], [], []>} : vector<8x256xf32>, vector<256x1xf32>, vector<8x1xf32> -> vector<8x1xf32>
    %102 = arith.mulf %98, %98 : vector<8x256xf32>
    %cst_51 = arith.constant dense<0.000000e+00> : vector<8x1xf32>
    %103 = tpu.matmul %102, %100, %cst_51 {dimension_numbers = #tpu.dot_dimension_numbers<[1], [0], [0], [1], [0, 0, 1, 1], [], []>} : vector<8x256xf32>, vector<256x1xf32>, vector<8x1xf32> -> vector<8x1xf32>
    %c0_52 = arith.constant 0 : index
    %c0_53 = arith.constant 0 : index
    %c0_54 = arith.constant 0 : index
    %104 = vector.load %arg10[%c0_52, %c0_53, %c0_54] : memref<1x8x2xf32, #tpu.memory_space<vmem>>, vector<1x8x1xf32>
    %105 = vector.shape_cast %104 : vector<1x8x1xf32> to vector<8x1xf32>
    %106 = vector.shape_cast %101 : vector<8x1xf32> to vector<1x8x1xf32>
    tpu.vector_store %arg10[%c0_52, %c0_53, %c0_54], %106 {strides = array<i32>} : memref<1x8x2xf32, #tpu.memory_space<vmem>>, vector<1x8x1xf32>,
    %c0_55 = arith.constant 0 : index
    %c0_56 = arith.constant 0 : index
    %c1_57 = arith.constant 1 : index
    %107 = vector.load %arg10[%c0_55, %c0_56, %c1_57] : memref<1x8x2xf32, #tpu.memory_space<vmem>>, vector<1x8x1xf32>
    %108 = vector.shape_cast %107 : vector<1x8x1xf32> to vector<8x1xf32>
    %109 = vector.shape_cast %103 : vector<8x1xf32> to vector<1x8x1xf32>
    tpu.vector_store %arg10[%c0_55, %c0_56, %c1_57], %109 {strides = array<i32>} : memref<1x8x2xf32, #tpu.memory_space<vmem>>, vector<1x8x1xf32>,
    return
  }
  func.func @transform_0(%arg0: i32) -> (i32, i32) {
    %c0_i32 = arith.constant 0 : i32
    %c0_i32_0 = arith.constant 0 : i32
    return %c0_i32, %arg0 : i32, i32
  }
  func.func @transform_1(%arg0: i32) -> (i32, i32) {
    %c0_i32 = arith.constant 0 : i32
    %c0_i32_0 = arith.constant 0 : i32
    %c0_i32_1 = arith.constant 0 : i32
    return %c0_i32, %c0_i32_0 : i32, i32
  }
  func.func @transform_2(%arg0: i32) -> (i32, i32) {
    %c0_i32 = arith.constant 0 : i32
    %c0_i32_0 = arith.constant 0 : i32
    %c0_i32_1 = arith.constant 0 : i32
    return %c0_i32, %c0_i32_0 : i32, i32
  }
  func.func @transform_3(%arg0: i32) -> (i32, i32) {
    %c0_i32 = arith.constant 0 : i32
    %c0_i32_0 = arith.constant 0 : i32
    %c0_i32_1 = arith.constant 0 : i32
    return %c0_i32, %c0_i32_0 : i32, i32
  }
  func.func @transform_4(%arg0: i32) -> (i32, i32) {
    %c0_i32 = arith.constant 0 : i32
    %c0_i32_0 = arith.constant 0 : i32
    %c0_i32_1 = arith.constant 0 : i32
    return %c0_i32, %c0_i32_0 : i32, i32
  }
  func.func @transform_5(%arg0: i32) -> (i32, i32) {
    %c0_i32 = arith.constant 0 : i32
    %c0_i32_0 = arith.constant 0 : i32
    %c0_i32_1 = arith.constant 0 : i32
    return %c0_i32, %c0_i32_0 : i32, i32
  }
  func.func @transform_6(%arg0: i32) -> (i32, i32) {
    %c0_i32 = arith.constant 0 : i32
    %c0_i32_0 = arith.constant 0 : i32
    %c0_i32_1 = arith.constant 0 : i32
    return %c0_i32, %c0_i32_0 : i32, i32
  }
  func.func @transform_7(%arg0: i32) -> (i32, i32) {
    %c0_i32 = arith.constant 0 : i32
    %c0_i32_0 = arith.constant 0 : i32
    %c0_i32_1 = arith.constant 0 : i32
    return %c0_i32, %c0_i32_0 : i32, i32
  }
  func.func @transform_8(%arg0: i32) -> (i32, i32) {
    %c0_i32 = arith.constant 0 : i32
    %c0_i32_0 = arith.constant 0 : i32
    return %c0_i32, %arg0 : i32, i32
  }
  func.func @transform_9(%arg0: i32) -> (i32, i32, i32) {
    %c0_i32 = arith.constant 0 : i32
    %c0_i32_0 = arith.constant 0 : i32
    %c0_i32_1 = arith.constant 0 : i32
    return %arg0, %c0_i32, %c0_i32_0 : i32, i32, i32
  }
}

module attributes {stable_mosaic.version = 11 : i64} {
  func.func @_bn_relu_kernel(%arg0: i32, %arg1: memref<8x256xf32, #tpu.memory_space<vmem>>, %arg2: memref<8x1xf32, #tpu.memory_space<vmem>>, %arg3: memref<8x1xf32, #tpu.memory_space<vmem>>, %arg4: memref<8x256xf32, #tpu.memory_space<vmem>>) attributes {dimension_semantics = [#tpu.dimension_semantics<parallel>], iteration_bounds = array<i64: 2>, scalar_prefetch = 0 : i64, scratch_operands = 0 : i64, tpu.core_type = #tpu.core_type<tc>, window_params = [{transform_indices = @transform_0, window_bounds = array<i64: 8, 256>}, {pipeline_mode = #tpu.pipeline_mode<synchronous>, transform_indices = @transform_1, window_bounds = array<i64: 8, 1>}, {pipeline_mode = #tpu.pipeline_mode<synchronous>, transform_indices = @transform_2, window_bounds = array<i64: 8, 1>}, {transform_indices = @transform_3, window_bounds = array<i64: 8, 256>}]} {
    %c0 = arith.constant 0 : index
    %c0_0 = arith.constant 0 : index
    %0 = vector.load %arg1[%c0, %c0_0] : memref<8x256xf32, #tpu.memory_space<vmem>>, vector<8x256xf32>
    %c0_1 = arith.constant 0 : index
    %c0_2 = arith.constant 0 : index
    %1 = vector.load %arg2[%c0_1, %c0_2] : memref<8x1xf32, #tpu.memory_space<vmem>>, vector<8x1xf32>
    %2 = vector.broadcast %1 : vector<8x1xf32> to vector<8x256xf32>
    %3 = arith.mulf %0, %2 : vector<8x256xf32>
    %c0_3 = arith.constant 0 : index
    %c0_4 = arith.constant 0 : index
    %4 = vector.load %arg3[%c0_3, %c0_4] : memref<8x1xf32, #tpu.memory_space<vmem>>, vector<8x1xf32>
    %5 = vector.broadcast %4 : vector<8x1xf32> to vector<8x256xf32>
    %6 = arith.addf %3, %5 : vector<8x256xf32>
    %cst = arith.constant 0.000000e+00 : f32
    %7 = vector.broadcast %cst : f32 to vector<8x256xf32>
    %8 = arith.maximumf %6, %7 : vector<8x256xf32>
    %c0_5 = arith.constant 0 : index
    %c0_6 = arith.constant 0 : index
    %9 = vector.load %arg4[%c0_5, %c0_6] : memref<8x256xf32, #tpu.memory_space<vmem>>, vector<8x256xf32>
    tpu.vector_store %arg4[%c0_5, %c0_6], %8 {strides = array<i32>} : memref<8x256xf32, #tpu.memory_space<vmem>>, vector<8x256xf32>,
    return
  }
  func.func @transform_0(%arg0: i32) -> (i32, i32) {
    %c0_i32 = arith.constant 0 : i32
    %c0_i32_0 = arith.constant 0 : i32
    return %c0_i32, %arg0 : i32, i32
  }
  func.func @transform_1(%arg0: i32) -> (i32, i32) {
    %c0_i32 = arith.constant 0 : i32
    %c0_i32_0 = arith.constant 0 : i32
    %c0_i32_1 = arith.constant 0 : i32
    return %c0_i32, %c0_i32_0 : i32, i32
  }
  func.func @transform_2(%arg0: i32) -> (i32, i32) {
    %c0_i32 = arith.constant 0 : i32
    %c0_i32_0 = arith.constant 0 : i32
    %c0_i32_1 = arith.constant 0 : i32
    return %c0_i32, %c0_i32_0 : i32, i32
  }
  func.func @transform_3(%arg0: i32) -> (i32, i32) {
    %c0_i32 = arith.constant 0 : i32
    %c0_i32_0 = arith.constant 0 : i32
    return %c0_i32, %arg0 : i32, i32
  }
}

</mosaic_0001>

<llo_original>
// kernel: shuffle_unit_forward.3
$region0: #{shuffle_unit_forward.3}
  #allocation0 [shape = 'u32[]', space=smem, size = 0x4, offset = 0x4, fixed_abs, tag = 'smem constant byte address 0x4 - core index']
  #allocation1 [shape = 'u32[144,128]{1,0:T(1,128)}', space=vmem, size = 0x12000, scoped, tag = 'internal scratch']
  %s0 = inlined_call_operand.vmem [shape: f32[4,512], index: 0, kind: input, shape index: {}]
  %s1 = inlined_call_operand.vmem [shape: f32[4,4], index: 1, kind: input, shape index: {}]
  %s2 = inlined_call_operand.vmem [shape: f32[4,1], index: 2, kind: input, shape index: {}]
  %s3 = inlined_call_operand.vmem [shape: f32[2,4,2], index: 3, kind: output, shape index: {}]
  %s4 = sld [smem:[#allocation0]]
  $region45: #{shuffle_unit_forward.3} parent=0
    _
  %s6 = ssub.s32 1, %s4
  %s7 = scalar_select 0, %s6, %s4
  loop: start=0, step=1, limit=4
  $region2: #{shuffle_unit_forward.3} parent=0 // loop_pre_header
    _
  $region3: #{shuffle_unit_forward.3} parent=0 // loop_header
    %s9 = sphi 0, %s13
    %p10 = scmp.ge.s32.totalorder %s9, 4
    %s19 = sphi 0, %s21
    %s22 = sphi 0, %s19
    %s23 = sphi 0, %s22
    %s39 = sphi 0, %s23
    %s43 = sphi 0, %s43
    %s45 = sphi 0, %s43
    %s46 = sphi 0, %s45
    %s60 = sphi 0, %s46
    %s64 = sphi 0, %s64
    %s66 = sphi 0, %s64
    %s67 = sphi 0, %s66
    %s81 = sphi 0, %s67
    %s87 = sphi 0, %s89
    %s90 = sphi 0, %s87
    %s91 = sphi 0, %s90
    %s107 = sphi 0, %s91
  $region4: #{shuffle_unit_forward.3} parent=0 // loop_header_branch
    %12 = sbr.rel (%p10) target = $region8
  $region5: #{shuffle_unit_forward.3} parent=0 // loop_body
    %s14 = ssub.s32 %s9, 1
    %s15 = ssub.s32 %s9, 2
    %s16 = sadd.s32 %s9, 1
    %s17 = ssub.s32 %s9, %s16
    %p18 = scmp.eq.s32.totalorder %s17, 0
    %s20 = sadd.s32 %s19, 1
    %s21 = scalar_select %p18, %s19, %s20
    %p24 = pneg %p18
    %p25 = scmp.eq.s32.totalorder %s9, 1
    %p26 = por %p24, %p25
    %p27 = scmp.ne.s32.totalorder %s19, %s22
    %p28 = scmp.eq.s32.totalorder %s9, 0
    %p29 = por %p27, %p28
    %p30 = scmp.ne.s32.totalorder %s19, %s22
    %p31 = scmp.eq.s32.totalorder %s14, 1
    %p32 = por %p30, %p31
    %p33 = scmp.ne.s32.totalorder %s22, %s23
    %p34 = scmp.eq.s32.totalorder %s14, 0
    %p35 = por %p33, %p34
    %p36 = scmp.ne.s32.totalorder %s22, %s23
    %p37 = scmp.eq.s32.totalorder %s15, 1
    %p38 = por %p36, %p37
    %p40 = scmp.ne.s32.totalorder %s23, %s39
    %p41 = scmp.eq.s32.totalorder %s15, 0
    %p42 = por %p40, %p41
    %s44 = sadd.s32 %s43, 1
    %p47 = scmp.eq.s32.totalorder %s9, 1
    %p48 = scmp.ne.s32.totalorder %s43, %s45
    %p49 = scmp.eq.s32.totalorder %s9, 0
    %p50 = por %p48, %p49
    %p51 = scmp.ne.s32.totalorder %s43, %s45
    %p52 = scmp.eq.s32.totalorder %s14, 1
    %p53 = por %p51, %p52
    %p54 = scmp.ne.s32.totalorder %s45, %s46
    %p55 = scmp.eq.s32.totalorder %s14, 0
    %p56 = por %p54, %p55
    %p57 = scmp.ne.s32.totalorder %s45, %s46
    %p58 = scmp.eq.s32.totalorder %s15, 1
    %p59 = por %p57, %p58
    %p61 = scmp.ne.s32.totalorder %s46, %s60
    %p62 = scmp.eq.s32.totalorder %s15, 0
    %p63 = por %p61, %p62
    %s65 = sadd.s32 %s64, 1
    %p68 = scmp.eq.s32.totalorder %s9, 1
    %p69 = scmp.ne.s32.totalorder %s64, %s66
    %p70 = scmp.eq.s32.totalorder %s9, 0
    %p71 = por %p69, %p70
    %p72 = scmp.ne.s32.totalorder %s64, %s66
    %p73 = scmp.eq.s32.totalorder %s14, 1
    %p74 = por %p72, %p73
    %p75 = scmp.ne.s32.totalorder %s66, %s67
    %p76 = scmp.eq.s32.totalorder %s14, 0
    %p77 = por %p75, %p76
    %p78 = scmp.ne.s32.totalorder %s66, %s67
    %p79 = scmp.eq.s32.totalorder %s15, 1
    %p80 = por %p78, %p79
    %p82 = scmp.ne.s32.totalorder %s67, %s81
    %p83 = scmp.eq.s32.totalorder %s15, 0
    %p84 = por %p82, %p83
    %s85 = ssub.s32 %s9, %s16
    %p86 = scmp.eq.s32.totalorder %s85, 0
    %s88 = sadd.s32 %s87, 1
    %s89 = scalar_select %p86, %s87, %s88
    %p92 = pneg %p86
    %p93 = scmp.eq.s32.totalorder %s9, 1
    %p94 = por %p92, %p93
    %p95 = scmp.ne.s32.totalorder %s87, %s90
    %p96 = scmp.eq.s32.totalorder %s9, 0
    %p97 = por %p95, %p96
    %p98 = scmp.ne.s32.totalorder %s87, %s90
    %p99 = scmp.eq.s32.totalorder %s14, 1
    %p100 = por %p98, %p99
    %p101 = scmp.ne.s32.totalorder %s90, %s91
    %p102 = scmp.eq.s32.totalorder %s14, 0
    %p103 = por %p101, %p102
    %p104 = scmp.ne.s32.totalorder %s90, %s91
    %p105 = scmp.eq.s32.totalorder %s15, 1
    %p106 = por %p104, %p105
    %p108 = scmp.ne.s32.totalorder %s91, %s107
    %p109 = scmp.eq.s32.totalorder %s15, 0
    %p110 = por %p108, %p109
    %p111 = scmp.le.s32.totalorder 1, %s9
    %p112 = scmp.lt.s32.totalorder %s9, 3
    %p113 = pnand %p111, %p112
    %p114 = pneg %p113
    // Predicated region
    $region9: #{shuffle_unit_forward.3} parent=5 // pred_check
      _
    $region10: #{shuffle_unit_forward.3} parent=5 // pred_check_branch
      %116 = sbr.rel (%p113) target = $region12
    $region11: #{shuffle_unit_forward.3} parent=5 // pred_region
      %s117 = ssub.s32 %s9, 1
      // Predicated region
      $region13: #{shuffle_unit_forward.3} parent=11 // pred_check
        %p118 = pneg %p56
      $region14: #{shuffle_unit_forward.3} parent=11 // pred_check_branch
        %120 = sbr.rel (%p118) target = $region16
      $region15: #{shuffle_unit_forward.3} parent=11 // pred_region
        _
      $region16: #{shuffle_unit_forward.3} parent=11 // pred_fallthru
        _
      // Predicated region
      $region17: #{shuffle_unit_forward.3} parent=11 // pred_check
        %p121 = pneg %p77
      $region18: #{shuffle_unit_forward.3} parent=11 // pred_check_branch
        %123 = sbr.rel (%p121) target = $region20
      $region19: #{shuffle_unit_forward.3} parent=11 // pred_region
        _
      $region20: #{shuffle_unit_forward.3} parent=11 // pred_fallthru
        _
    $region12: #{shuffle_unit_forward.3} parent=5 // pred_fallthru
      _
    %p124 = scmp.lt.s32.totalorder %s9, 2
    // Predicated region
    $region21: #{shuffle_unit_forward.3} parent=5 // pred_check
      %p125 = pneg %p124
    $region22: #{shuffle_unit_forward.3} parent=5 // pred_check_branch
      %127 = sbr.rel (%p125) target = $region24
    $region23: #{shuffle_unit_forward.3} parent=5 // pred_region
      // Predicated region
      $region25: #{shuffle_unit_forward.3} parent=23 // pred_check
        %p128 = pneg %p29
      $region26: #{shuffle_unit_forward.3} parent=23 // pred_check_branch
        %130 = sbr.rel (%p128) target = $region28
      $region27: #{shuffle_unit_forward.3} parent=23 // pred_region
        %s131 = smul.u32 2, %s9
        %p132 = scmp.lt.s32.totalorder %s131, 3
        %s133 = scalar_select %p132, %s131, 3
        %s134 = smul.addr %s133, 4
        %s135 = scalar_lea.vmem %s0, %s134
        %s136 = smul.u32 2, %s9
      $region28: #{shuffle_unit_forward.3} parent=23 // pred_fallthru
        _
    $region24: #{shuffle_unit_forward.3} parent=5 // pred_fallthru
      _
    %p137 = scmp.le.s32.totalorder 1, %s9
    %p138 = scmp.lt.s32.totalorder %s9, 3
    %p139 = pnand %p137, %p138
    %p140 = pneg %p139
    // Predicated region
    $region29: #{shuffle_unit_forward.3} parent=5 // pred_check
      _
    $region30: #{shuffle_unit_forward.3} parent=5 // pred_check_branch
      %142 = sbr.rel (%p139) target = $region32
    $region31: #{shuffle_unit_forward.3} parent=5 // pred_region
      %s143 = ssub.s32 %s9, 1
      %s144 = smul.u32 2, %s14
      %p145 = scmp.lt.s32.totalorder %s144, 3
      %s146 = scalar_select %p145, %s144, 3
      %s147 = smul.addr %s146, 4
      %s148 = scalar_lea.vmem %s0, %s147
      %p149 = pneg %p35
      %p150 = pneg %p32
      %p151 = pneg %p56
      %p152 = pneg %p53
      %p153 = pneg %p77
      %p154 = pneg %p74
      %p155 = pneg %p103
      %p156 = pneg %p100
      %p157 = scmp.lt.s32.totalorder %s14, 1
      %s158 = scalar_select %p157, %s14, 1
      %s159 = smul.addr %s158, 4
      %s160 = scalar_lea.vmem %s3, %s159
      %s161 = smul.u32 2, %s14
      %p162 = scmp.lt.s32.totalorder %s161, 3
      %s163 = scalar_select %p162, %s161, 3
      %s164 = smul.addr %s163, 4
      %s165 = scalar_lea.vmem %s0, %s164
      %s166 = smul.u32 2, %s14
      %p167 = scmp.lt.s32.totalorder %s14, 1
      %s168 = scalar_select %p167, %s14, 1
      %s169 = smul.addr %s168, 4
      %s170 = scalar_lea.vmem %s3, %s169
      %v171 = vld [vmem:[%s1] sm:$0xf]
      %v172 = vld [vmem:[%s165] sm:$0xff]
      %v173 = vld [vmem:[%s2] sm:$0xf]
      %175 = vset.pattern.permute.xlu0 0
      %176 = vperm.xlu0 %175, %v173
      %v177 = vpop.permute.xlu0 %176
      %v180 = vcombine.high %v172, %v172
      %vm181 = vcmask 31744
      %v183 = vsel %vm181, %v171, 0
      %vm185 = vcmask 1043456
      %v186 = vsel %vm185, %v172, 0
      %v188 = vsel %vm185, %v180, 0
      %190 = vmatprep.subr.mxu0 %v188
      %191 = vmatpush1.msra.mxu0 %v186
      %192 = vmatprep.subr.mxu0 0.0
      %193 = vmatpush1.msra.mxu0 0.0
      %194 = vmatprep.subr.mxu0 0.0
      %195 = vmatpush1.msra.mxu0 0.0
      %196 = vmatprep.subr.mxu0 0.0
      %197 = vmatpush1.msra.mxu0 0.0
      %198 = vmatprep.subr.mxu0 0.0
      %199 = vmatpush1.msra.mxu0 0.0
      %200 = vmatprep.subr.mxu0 0.0
      %201 = vmatpush1.msra.mxu0 0.0
      %202 = vmatprep.subr.mxu0 0.0
      %203 = vmatpush1.msra.mxu0 0.0
      %204 = vmatprep.subr.mxu0 0.0
      %205 = vmatpush1.msra.mxu0 0.0
      %206 = vmatprep.subr.mxu0 0.0
      %207 = vmatpush1.msra.mxu0 0.0
      %208 = vmatprep.subr.mxu0 0.0
      %209 = vmatpush1.msra.mxu0 0.0
      %210 = vmatprep.subr.mxu0 0.0
      %211 = vmatpush1.msra.mxu0 0.0
      %212 = vmatprep.subr.mxu0 0.0
      %213 = vmatpush1.msra.mxu0 0.0
      %214 = vmatprep.subr.mxu0 0.0
      %215 = vmatpush1.msra.mxu0 0.0
      %216 = vmatprep.subr.mxu0 0.0
      %217 = vmatpush1.msra.mxu0 0.0
      %218 = vmatprep.subr.mxu0 0.0
      %219 = vmatpush1.msra.mxu0 0.0
      %220 = vmatprep.subr.mxu0 0.0
      %221 = vmatpush1.msra.mxu0 0.0
      %222 = vmatprep.subr.mxu0 0.0
      %223 = vmatpush1.msra.mxu0 0.0
      %224 = vmatprep.subr.mxu0 0.0
      %225 = vmatpush1.msra.mxu0 0.0
      %226 = vmatprep.subr.mxu0 0.0
      %227 = vmatpush1.msra.mxu0 0.0
      %228 = vmatprep.subr.mxu0 0.0
      %229 = vmatpush1.msra.mxu0 0.0
      %230 = vmatprep.subr.mxu0 0.0
      %231 = vmatpush1.msra.mxu0 0.0
      %232 = vmatprep.subr.mxu0 0.0
      %233 = vmatpush1.msra.mxu0 0.0
      %234 = vmatprep.subr.mxu0 0.0
      %235 = vmatpush1.msra.mxu0 0.0
      %236 = vmatprep.subr.mxu0 0.0
      %237 = vmatpush1.msra.mxu0 0.0
      %238 = vmatprep.subr.mxu0 0.0
      %239 = vmatpush1.msra.mxu0 0.0
      %240 = vmatprep.subr.mxu0 0.0
      %241 = vmatpush1.msra.mxu0 0.0
      %242 = vmatprep.subr.mxu0 0.0
      %243 = vmatpush1.msra.mxu0 0.0
      %244 = vmatprep.subr.mxu0 0.0
      %245 = vmatpush1.msra.mxu0 0.0
      %246 = vmatprep.subr.mxu0 0.0
      %247 = vmatpush1.msra.mxu0 0.0
      %248 = vmatprep.subr.mxu0 0.0
      %249 = vmatpush1.msra.mxu0 0.0
      %250 = vmatprep.subr.mxu0 0.0
      %251 = vmatpush1.msra.mxu0 0.0
      %252 = vmatprep.subr.mxu0 0.0
      %253 = vmatpush1.msra.mxu0 0.0
      %254 = vmatprep.mubr.f32.mxu0 0.0
      %255 = vmatmul.mubr.f32.gmra.mrb[0].mxu0 %v183
      %v256 = vpop.f32.mrb[0].mxu0
      %v257 = vadd.f32 %v177, %v256
      %v258 = vpop.f32.mrb[0].mxu0
      %v259 = vadd.f32 %v177, %v258
      %260 = vdwg.mxu0
      %261 = vmatprep.subr.mxu0 0.0
      %262 = vmatpush1.msra.mxu0 1.0
      %263 = vmatprep.subr.mxu0 0.0
      %264 = vmatpush1.msra.mxu0 1.0
      %265 = vmatprep.subr.mxu0 0.0
      %266 = vmatpush1.msra.mxu0 1.0
      %267 = vmatprep.subr.mxu0 0.0
      %268 = vmatpush1.msra.mxu0 1.0
      %269 = vmatprep.subr.mxu0 0.0
      %270 = vmatpush1.msra.mxu0 1.0
      %271 = vmatprep.subr.mxu0 0.0
      %272 = vmatpush1.msra.mxu0 1.0
      %273 = vmatprep.subr.mxu0 0.0
      %274 = vmatpush1.msra.mxu0 1.0
      %275 = vmatprep.subr.mxu0 0.0
      %276 = vmatpush1.msra.mxu0 1.0
      %277 = vmatprep.subr.mxu0 0.0
      %278 = vmatpush1.msra.mxu0 1.0
      %279 = vmatprep.subr.mxu0 0.0
      %280 = vmatpush1.msra.mxu0 1.0
      %281 = vmatprep.subr.mxu0 0.0
      %282 = vmatpush1.msra.mxu0 1.0
      %283 = vmatprep.subr.mxu0 0.0
      %284 = vmatpush1.msra.mxu0 1.0
      %285 = vmatprep.subr.mxu0 0.0
      %286 = vmatpush1.msra.mxu0 1.0
      %287 = vmatprep.subr.mxu0 0.0
      %288 = vmatpush1.msra.mxu0 1.0
      %289 = vmatprep.subr.mxu0 0.0
      %290 = vmatpush1.msra.mxu0 1.0
      %291 = vmatprep.subr.mxu0 0.0
      %292 = vmatpush1.msra.mxu0 1.0
      %293 = vmatprep.subr.mxu0 0.0
      %294 = vmatpush1.msra.mxu0 1.0
      %295 = vmatprep.subr.mxu0 0.0
      %296 = vmatpush1.msra.mxu0 1.0
      %297 = vmatprep.subr.mxu0 0.0
      %298 = vmatpush1.msra.mxu0 1.0
      %299 = vmatprep.subr.mxu0 0.0
      %300 = vmatpush1.msra.mxu0 1.0
      %301 = vmatprep.subr.mxu0 0.0
      %302 = vmatpush1.msra.mxu0 1.0
      %303 = vmatprep.subr.mxu0 0.0
      %304 = vmatpush1.msra.mxu0 1.0
      %305 = vmatprep.subr.mxu0 0.0
      %306 = vmatpush1.msra.mxu0 1.0
      %307 = vmatprep.subr.mxu0 0.0
      %308 = vmatpush1.msra.mxu0 1.0
      %309 = vmatprep.subr.mxu0 0.0
      %310 = vmatpush1.msra.mxu0 1.0
      %311 = vmatprep.subr.mxu0 0.0
      %312 = vmatpush1.msra.mxu0 1.0
      %313 = vmatprep.subr.mxu0 0.0
      %314 = vmatpush1.msra.mxu0 1.0
      %315 = vmatprep.subr.mxu0 0.0
      %316 = vmatpush1.msra.mxu0 1.0
      %317 = vmatprep.subr.mxu0 0.0
      %318 = vmatpush1.msra.mxu0 1.0
      %319 = vmatprep.subr.mxu0 0.0
      %320 = vmatpush1.msra.mxu0 1.0
      %321 = vmatprep.subr.mxu0 0.0
      %322 = vmatpush1.msra.mxu0 1.0
      %323 = vmatprep.subr.mxu0 0.0
      %324 = vmatpush1.msra.mxu0 1.0
      %325 = vmatprep.mubr.f32.mxu0 %v259
      %326 = vmatmul.mubr.f32.gmra.mrb[0].mxu0 %v257
      %v327 = vpop.f32.mrb[0].mxu0
      %v328 = vadd.f32 0.0, %v327
      %v329 = vpop.f32.mrb[0].mxu0
      %330 = vdwg.mxu0
      %v331 = vmul.f32 %v257, %v257
      %v332 = vmul.f32 %v259, %v259
      %333 = vmatprep.subr.mxu0 0.0
      %334 = vmatpush1.msra.mxu0 1.0
      %335 = vmatprep.subr.mxu0 0.0
      %336 = vmatpush1.msra.mxu0 1.0
      %337 = vmatprep.subr.mxu0 0.0
      %338 = vmatpush1.msra.mxu0 1.0
      %339 = vmatprep.subr.mxu0 0.0
      %340 = vmatpush1.msra.mxu0 1.0
      %341 = vmatprep.subr.mxu0 0.0
      %342 = vmatpush1.msra.mxu0 1.0
      %343 = vmatprep.subr.mxu0 0.0
      %344 = vmatpush1.msra.mxu0 1.0
      %345 = vmatprep.subr.mxu0 0.0
      %346 = vmatpush1.msra.mxu0 1.0
      %347 = vmatprep.subr.mxu0 0.0
      %348 = vmatpush1.msra.mxu0 1.0
      %349 = vmatprep.subr.mxu0 0.0
      %350 = vmatpush1.msra.mxu0 1.0
      %351 = vmatprep.subr.mxu0 0.0
      %352 = vmatpush1.msra.mxu0 1.0
      %353 = vmatprep.subr.mxu0 0.0
      %354 = vmatpush1.msra.mxu0 1.0
      %355 = vmatprep.subr.mxu0 0.0
      %356 = vmatpush1.msra.mxu0 1.0
      %357 = vmatprep.subr.mxu0 0.0
      %358 = vmatpush1.msra.mxu0 1.0
      %359 = vmatprep.subr.mxu0 0.0
      %360 = vmatpush1.msra.mxu0 1.0
      %361 = vmatprep.subr.mxu0 0.0
      %362 = vmatpush1.msra.mxu0 1.0
      %363 = vmatprep.subr.mxu0 0.0
      %364 = vmatpush1.msra.mxu0 1.0
      %365 = vmatprep.subr.mxu0 0.0
      %366 = vmatpush1.msra.mxu0 1.0
      %367 = vmatprep.subr.mxu0 0.0
      %368 = vmatpush1.msra.mxu0 1.0
      %369 = vmatprep.subr.mxu0 0.0
      %370 = vmatpush1.msra.mxu0 1.0
      %371 = vmatprep.subr.mxu0 0.0
      %372 = vmatpush1.msra.mxu0 1.0
      %373 = vmatprep.subr.mxu0 0.0
      %374 = vmatpush1.msra.mxu0 1.0
      %375 = vmatprep.subr.mxu0 0.0
      %376 = vmatpush1.msra.mxu0 1.0
      %377 = vmatprep.subr.mxu0 0.0
      %378 = vmatpush1.msra.mxu0 1.0
      %379 = vmatprep.subr.mxu0 0.0
      %380 = vmatpush1.msra.mxu0 1.0
      %381 = vmatprep.subr.mxu0 0.0
      %382 = vmatpush1.msra.mxu0 1.0
      %383 = vmatprep.subr.mxu0 0.0
      %384 = vmatpush1.msra.mxu0 1.0
      %385 = vmatprep.subr.mxu0 0.0
      %386 = vmatpush1.msra.mxu0 1.0
      %387 = vmatprep.subr.mxu0 0.0
      %388 = vmatpush1.msra.mxu0 1.0
      %389 = vmatprep.subr.mxu0 0.0
      %390 = vmatpush1.msra.mxu0 1.0
      %391 = vmatprep.subr.mxu0 0.0
      %392 = vmatpush1.msra.mxu0 1.0
      %393 = vmatprep.subr.mxu0 0.0
      %394 = vmatpush1.msra.mxu0 1.0
      %395 = vmatprep.subr.mxu0 0.0
      %396 = vmatpush1.msra.mxu0 1.0
      %397 = vmatprep.mubr.f32.mxu0 %v332
      %398 = vmatmul.mubr.f32.gmra.mrb[0].mxu0 %v331
      %v399 = vpop.f32.mrb[0].mxu0
      %v400 = vadd.f32 0.0, %v399
      %v401 = vpop.f32.mrb[0].mxu0
      %402 = vdwg.mxu0
      %vm403 = vcmask 3072
      %404 = vst.msk [vmem:[%s170] sm:$0xf] %vm403, %v328
      %406 = vrot.lane.b32.xlu0 %v400, 1
      %v407 = vpop.permute.xlu0 %406
      %vm409 = vcmask 11272
      %410 = vst.msk [vmem:[%s170] sm:$0xf] %vm409, %v407
      %p411 = scmp.lt.s32.totalorder %s14, 1
      %s412 = scalar_select %p411, %s14, 1
      %s413 = smul.addr %s412, 4
      %s414 = scalar_lea.vmem %s3, %s413
      // Predicated region
      $region33: #{shuffle_unit_forward.3} parent=31 // pred_check
        %p415 = pneg %p100
      $region34: #{shuffle_unit_forward.3} parent=31 // pred_check_branch
        %417 = sbr.rel (%p415) target = $region36
      $region35: #{shuffle_unit_forward.3} parent=31 // pred_region
        _
      $region36: #{shuffle_unit_forward.3} parent=31 // pred_fallthru
        _
    $region32: #{shuffle_unit_forward.3} parent=5 // pred_fallthru
      _
    %p418 = scmp.le.s32.totalorder 2, %s9
    // Predicated region
    $region37: #{shuffle_unit_forward.3} parent=5 // pred_check
      %p419 = pneg %p418
    $region38: #{shuffle_unit_forward.3} parent=5 // pred_check_branch
      %421 = sbr.rel (%p419) target = $region40
    $region39: #{shuffle_unit_forward.3} parent=5 // pred_region
      %s422 = ssub.s32 %s9, 2
      // Predicated region
      $region41: #{shuffle_unit_forward.3} parent=39 // pred_check
        %p423 = pneg %p106
      $region42: #{shuffle_unit_forward.3} parent=39 // pred_check_branch
        %425 = sbr.rel (%p423) target = $region44
      $region43: #{shuffle_unit_forward.3} parent=39 // pred_region
        %p426 = scmp.lt.s32.totalorder %s15, 1
        %s427 = scalar_select %p426, %s15, 1
        %s428 = smul.addr %s427, 4
        %s429 = scalar_lea.vmem %s3, %s428
      $region44: #{shuffle_unit_forward.3} parent=39 // pred_fallthru
        _
    $region40: #{shuffle_unit_forward.3} parent=5 // pred_fallthru
      _
  $region6: #{shuffle_unit_forward.3} parent=0 // loop_footer
    %s13 = sadd.s32 1, %s9
  $region7: #{shuffle_unit_forward.3} parent=0 // loop_footer_branch
    %8 = sbr.rel target = $region3
  $region8: #{shuffle_unit_forward.3} parent=0 // loop_exit
    _

// kernel: shuffle_unit_forward.5
$region0: #{shuffle_unit_forward.5}
  #allocation0 [shape = 'u32[]', space=smem, size = 0x4, offset = 0x4, fixed_abs, tag = 'smem constant byte address 0x4 - core index']
  #allocation1 [shape = 'u32[144,128]{1,0:T(1,128)}', space=vmem, size = 0x12000, scoped, tag = 'internal scratch']
  %s0 = inlined_call_operand.vmem [shape: f32[8,512], index: 0, kind: input, shape index: {}]
  %s1 = inlined_call_operand.vmem [shape: f32[8,1], index: 1, kind: input, shape index: {}]
  %s2 = inlined_call_operand.vmem [shape: f32[8,1], index: 2, kind: input, shape index: {}]
  %s3 = inlined_call_operand.vmem [shape: f32[8,512], index: 3, kind: output, shape index: {}]
  %s4 = sld [smem:[#allocation0]]
  $region45: #{shuffle_unit_forward.5} parent=0
    _
  %s6 = ssub.s32 1, %s4
  %s7 = scalar_select 0, %s6, %s4
  loop: start=0, step=1, limit=4
  $region2: #{shuffle_unit_forward.5} parent=0 // loop_pre_header
    _
  $region3: #{shuffle_unit_forward.5} parent=0 // loop_header
    %s9 = sphi 0, %s13
    %p10 = scmp.ge.s32.totalorder %s9, 4
    %s19 = sphi 0, %s21
    %s22 = sphi 0, %s19
    %s23 = sphi 0, %s22
    %s39 = sphi 0, %s23
    %s43 = sphi 0, %s43
    %s45 = sphi 0, %s43
    %s46 = sphi 0, %s45
    %s60 = sphi 0, %s46
    %s64 = sphi 0, %s64
    %s66 = sphi 0, %s64
    %s67 = sphi 0, %s66
    %s81 = sphi 0, %s67
    %s87 = sphi 0, %s89
    %s90 = sphi 0, %s87
    %s91 = sphi 0, %s90
    %s107 = sphi 0, %s91
  $region4: #{shuffle_unit_forward.5} parent=0 // loop_header_branch
    %12 = sbr.rel (%p10) target = $region8
  $region5: #{shuffle_unit_forward.5} parent=0 // loop_body
    %s14 = ssub.s32 %s9, 1
    %s15 = ssub.s32 %s9, 2
    %s16 = sadd.s32 %s9, 1
    %s17 = ssub.s32 %s9, %s16
    %p18 = scmp.eq.s32.totalorder %s17, 0
    %s20 = sadd.s32 %s19, 1
    %s21 = scalar_select %p18, %s19, %s20
    %p24 = pneg %p18
    %p25 = scmp.eq.s32.totalorder %s9, 1
    %p26 = por %p24, %p25
    %p27 = scmp.ne.s32.totalorder %s19, %s22
    %p28 = scmp.eq.s32.totalorder %s9, 0
    %p29 = por %p27, %p28
    %p30 = scmp.ne.s32.totalorder %s19, %s22
    %p31 = scmp.eq.s32.totalorder %s14, 1
    %p32 = por %p30, %p31
    %p33 = scmp.ne.s32.totalorder %s22, %s23
    %p34 = scmp.eq.s32.totalorder %s14, 0
    %p35 = por %p33, %p34
    %p36 = scmp.ne.s32.totalorder %s22, %s23
    %p37 = scmp.eq.s32.totalorder %s15, 1
    %p38 = por %p36, %p37
    %p40 = scmp.ne.s32.totalorder %s23, %s39
    %p41 = scmp.eq.s32.totalorder %s15, 0
    %p42 = por %p40, %p41
    %s44 = sadd.s32 %s43, 1
    %p47 = scmp.eq.s32.totalorder %s9, 1
    %p48 = scmp.ne.s32.totalorder %s43, %s45
    %p49 = scmp.eq.s32.totalorder %s9, 0
    %p50 = por %p48, %p49
    %p51 = scmp.ne.s32.totalorder %s43, %s45
    %p52 = scmp.eq.s32.totalorder %s14, 1
    %p53 = por %p51, %p52
    %p54 = scmp.ne.s32.totalorder %s45, %s46
    %p55 = scmp.eq.s32.totalorder %s14, 0
    %p56 = por %p54, %p55
    %p57 = scmp.ne.s32.totalorder %s45, %s46
    %p58 = scmp.eq.s32.totalorder %s15, 1
    %p59 = por %p57, %p58
    %p61 = scmp.ne.s32.totalorder %s46, %s60
    %p62 = scmp.eq.s32.totalorder %s15, 0
    %p63 = por %p61, %p62
    %s65 = sadd.s32 %s64, 1
    %p68 = scmp.eq.s32.totalorder %s9, 1
    %p69 = scmp.ne.s32.totalorder %s64, %s66
    %p70 = scmp.eq.s32.totalorder %s9, 0
    %p71 = por %p69, %p70
    %p72 = scmp.ne.s32.totalorder %s64, %s66
    %p73 = scmp.eq.s32.totalorder %s14, 1
    %p74 = por %p72, %p73
    %p75 = scmp.ne.s32.totalorder %s66, %s67
    %p76 = scmp.eq.s32.totalorder %s14, 0
    %p77 = por %p75, %p76
    %p78 = scmp.ne.s32.totalorder %s66, %s67
    %p79 = scmp.eq.s32.totalorder %s15, 1
    %p80 = por %p78, %p79
    %p82 = scmp.ne.s32.totalorder %s67, %s81
    %p83 = scmp.eq.s32.totalorder %s15, 0
    %p84 = por %p82, %p83
    %s85 = ssub.s32 %s9, %s16
    %p86 = scmp.eq.s32.totalorder %s85, 0
    %s88 = sadd.s32 %s87, 1
    %s89 = scalar_select %p86, %s87, %s88
    %p92 = pneg %p86
    %p93 = scmp.eq.s32.totalorder %s9, 1
    %p94 = por %p92, %p93
    %p95 = scmp.ne.s32.totalorder %s87, %s90
    %p96 = scmp.eq.s32.totalorder %s9, 0
    %p97 = por %p95, %p96
    %p98 = scmp.ne.s32.totalorder %s87, %s90
    %p99 = scmp.eq.s32.totalorder %s14, 1
    %p100 = por %p98, %p99
    %p101 = scmp.ne.s32.totalorder %s90, %s91
    %p102 = scmp.eq.s32.totalorder %s14, 0
    %p103 = por %p101, %p102
    %p104 = scmp.ne.s32.totalorder %s90, %s91
    %p105 = scmp.eq.s32.totalorder %s15, 1
    %p106 = por %p104, %p105
    %p108 = scmp.ne.s32.totalorder %s91, %s107
    %p109 = scmp.eq.s32.totalorder %s15, 0
    %p110 = por %p108, %p109
    %p111 = scmp.le.s32.totalorder 1, %s9
    %p112 = scmp.lt.s32.totalorder %s9, 3
    %p113 = pnand %p111, %p112
    %p114 = pneg %p113
    // Predicated region
    $region9: #{shuffle_unit_forward.5} parent=5 // pred_check
      _
    $region10: #{shuffle_unit_forward.5} parent=5 // pred_check_branch
      %116 = sbr.rel (%p113) target = $region12
    $region11: #{shuffle_unit_forward.5} parent=5 // pred_region
      %s117 = ssub.s32 %s9, 1
      // Predicated region
      $region13: #{shuffle_unit_forward.5} parent=11 // pred_check
        %p118 = pneg %p56
      $region14: #{shuffle_unit_forward.5} parent=11 // pred_check_branch
        %120 = sbr.rel (%p118) target = $region16
      $region15: #{shuffle_unit_forward.5} parent=11 // pred_region
        _
      $region16: #{shuffle_unit_forward.5} parent=11 // pred_fallthru
        _
      // Predicated region
      $region17: #{shuffle_unit_forward.5} parent=11 // pred_check
        %p121 = pneg %p77
      $region18: #{shuffle_unit_forward.5} parent=11 // pred_check_branch
        %123 = sbr.rel (%p121) target = $region20
      $region19: #{shuffle_unit_forward.5} parent=11 // pred_region
        _
      $region20: #{shuffle_unit_forward.5} parent=11 // pred_fallthru
        _
    $region12: #{shuffle_unit_forward.5} parent=5 // pred_fallthru
      _
    %p124 = scmp.lt.s32.totalorder %s9, 2
    // Predicated region
    $region21: #{shuffle_unit_forward.5} parent=5 // pred_check
      %p125 = pneg %p124
    $region22: #{shuffle_unit_forward.5} parent=5 // pred_check_branch
      %127 = sbr.rel (%p125) target = $region24
    $region23: #{shuffle_unit_forward.5} parent=5 // pred_region
      // Predicated region
      $region25: #{shuffle_unit_forward.5} parent=23 // pred_check
        %p128 = pneg %p29
      $region26: #{shuffle_unit_forward.5} parent=23 // pred_check_branch
        %130 = sbr.rel (%p128) target = $region28
      $region27: #{shuffle_unit_forward.5} parent=23 // pred_region
        %s131 = smul.u32 2, %s9
        %p132 = scmp.lt.s32.totalorder %s131, 3
        %s133 = scalar_select %p132, %s131, 3
        %s134 = smul.addr %s133, 8
        %s135 = scalar_lea.vmem %s0, %s134
        %s136 = smul.u32 2, %s9
      $region28: #{shuffle_unit_forward.5} parent=23 // pred_fallthru
        _
    $region24: #{shuffle_unit_forward.5} parent=5 // pred_fallthru
      _
    %p137 = scmp.le.s32.totalorder 1, %s9
    %p138 = scmp.lt.s32.totalorder %s9, 3
    %p139 = pnand %p137, %p138
    %p140 = pneg %p139
    // Predicated region
    $region29: #{shuffle_unit_forward.5} parent=5 // pred_check
      _
    $region30: #{shuffle_unit_forward.5} parent=5 // pred_check_branch
      %142 = sbr.rel (%p139) target = $region32
    $region31: #{shuffle_unit_forward.5} parent=5 // pred_region
      %s143 = ssub.s32 %s9, 1
      %s144 = smul.u32 2, %s14
      %p145 = scmp.lt.s32.totalorder %s144, 3
      %s146 = scalar_select %p145, %s144, 3
      %s147 = smul.addr %s146, 8
      %s148 = scalar_lea.vmem %s0, %s147
      %p149 = pneg %p35
      %p150 = pneg %p32
      %p151 = pneg %p56
      %p152 = pneg %p53
      %p153 = pneg %p77
      %p154 = pneg %p74
      %p155 = pneg %p103
      %p156 = pneg %p100
      %s157 = smul.u32 2, %s14
      %p158 = scmp.lt.s32.totalorder %s157, 3
      %s159 = scalar_select %p158, %s157, 3
      %s160 = smul.addr %s159, 8
      %s161 = scalar_lea.vmem %s3, %s160
      %s162 = smul.u32 2, %s14
      %p163 = scmp.lt.s32.totalorder %s162, 3
      %s164 = scalar_select %p163, %s162, 3
      %s165 = smul.addr %s164, 8
      %s166 = scalar_lea.vmem %s0, %s165
      %s167 = smul.u32 2, %s14
      %s168 = smul.u32 2, %s14
      %p169 = scmp.lt.s32.totalorder %s168, 3
      %s170 = scalar_select %p169, %s168, 3
      %s171 = smul.addr %s170, 8
      %s172 = scalar_lea.vmem %s3, %s171
      %s173 = smul.u32 2, %s14
      %v174 = vld [vmem:[%s166] sm:$0xff]
      %v175 = vld [vmem:[%s166 + $0x8] sm:$0xff]
      %v176 = vld [vmem:[%s1] sm:$0xff]
      %178 = vset.pattern.permute.xlu0 0
      %179 = vperm.xlu0 %178, %v176
      %v180 = vpop.permute.xlu0 %179
      %v182 = vmul.f32 %v174, %v180
      %v183 = vmul.f32 %v175, %v180
      %v184 = vld [vmem:[%s2] sm:$0xff]
      %186 = vset.pattern.permute.xlu0 0
      %187 = vperm.xlu0 %186, %v184
      %v188 = vpop.permute.xlu0 %187
      %v190 = vadd.f32 %v182, %v188
      %v191 = vadd.f32 %v183, %v188
      %v192 = vmax.f32 %v190, 0.0
      %v193 = vmax.f32 %v191, 0.0
      %194 = vst [vmem:[%s172] sm:$0xff] %v192
      %195 = vst [vmem:[%s172 + $0x8] sm:$0xff] %v193
      %s196 = smul.u32 2, %s14
      %p197 = scmp.lt.s32.totalorder %s196, 3
      %s198 = scalar_select %p197, %s196, 3
      %s199 = smul.addr %s198, 8
      %s200 = scalar_lea.vmem %s3, %s199
      // Predicated region
      $region33: #{shuffle_unit_forward.5} parent=31 // pred_check
        %p201 = pneg %p100
      $region34: #{shuffle_unit_forward.5} parent=31 // pred_check_branch
        %203 = sbr.rel (%p201) target = $region36
      $region35: #{shuffle_unit_forward.5} parent=31 // pred_region
        %s204 = smul.u32 2, %s14
      $region36: #{shuffle_unit_forward.5} parent=31 // pred_fallthru
        _
    $region32: #{shuffle_unit_forward.5} parent=5 // pred_fallthru
      _
    %p205 = scmp.le.s32.totalorder 2, %s9
    // Predicated region
    $region37: #{shuffle_unit_forward.5} parent=5 // pred_check
      %p206 = pneg %p205
    $region38: #{shuffle_unit_forward.5} parent=5 // pred_check_branch
      %208 = sbr.rel (%p206) target = $region40
    $region39: #{shuffle_unit_forward.5} parent=5 // pred_region
      %s209 = ssub.s32 %s9, 2
      // Predicated region
      $region41: #{shuffle_unit_forward.5} parent=39 // pred_check
        %p210 = pneg %p106
      $region42: #{shuffle_unit_forward.5} parent=39 // pred_check_branch
        %212 = sbr.rel (%p210) target = $region44
      $region43: #{shuffle_unit_forward.5} parent=39 // pred_region
        %s213 = smul.u32 2, %s15
        %p214 = scmp.lt.s32.totalorder %s213, 3
        %s215 = scalar_select %p214, %s213, 3
        %s216 = smul.addr %s215, 8
        %s217 = scalar_lea.vmem %s3, %s216
      $region44: #{shuffle_unit_forward.5} parent=39 // pred_fallthru
        _
    $region40: #{shuffle_unit_forward.5} parent=5 // pred_fallthru
      _
  $region6: #{shuffle_unit_forward.5} parent=0 // loop_footer
    %s13 = sadd.s32 1, %s9
  $region7: #{shuffle_unit_forward.5} parent=0 // loop_footer_branch
    %8 = sbr.rel target = $region3
  $region8: #{shuffle_unit_forward.5} parent=0 // loop_exit
    _

// kernel: shuffle_unit_forward.4
$region0: #{shuffle_unit_forward.4}
  #allocation0 [shape = 'u32[]', space=smem, size = 0x4, offset = 0x4, fixed_abs, tag = 'smem constant byte address 0x4 - core index']
  #allocation1 [shape = 'u32[144,128]{1,0:T(1,128)}', space=vmem, size = 0x12000, scoped, tag = 'internal scratch']
  %s0 = inlined_call_operand.vmem [shape: f32[4,512], index: 0, kind: input, shape index: {}]
  %s1 = inlined_call_operand.vmem [shape: f32[4,4], index: 1, kind: input, shape index: {}]
  %s2 = inlined_call_operand.vmem [shape: f32[4,1], index: 2, kind: input, shape index: {}]
  %s3 = inlined_call_operand.vmem [shape: f32[4,1], index: 3, kind: input, shape index: {}]
  %s4 = inlined_call_operand.vmem [shape: f32[4,1], index: 4, kind: input, shape index: {}]
  %s5 = inlined_call_operand.vmem [shape: f32[2,256], index: 5, kind: input, shape index: {}]
  %s6 = inlined_call_operand.vmem [shape: f32[8,36], index: 6, kind: input, shape index: {}]
  %s7 = inlined_call_operand.vmem [shape: f32[8,1], index: 7, kind: input, shape index: {}]
  %s8 = inlined_call_operand.vmem [shape: f32[8,512], index: 8, kind: output, shape index: {0}]
  %s9 = inlined_call_operand.vmem [shape: f32[2,8,2], index: 9, kind: output, shape index: {1}]
  %10 = xla_tuple %s8, %s9
  %s11 = sld [smem:[#allocation0]]
  $region73: #{shuffle_unit_forward.4} parent=0
    _
  %s13 = ssub.s32 1, %s11
  %s14 = scalar_select 0, %s13, %s11
  loop: start=0, step=1, limit=4
  $region2: #{shuffle_unit_forward.4} parent=0 // loop_pre_header
    _
  $region3: #{shuffle_unit_forward.4} parent=0 // loop_header
    %s16 = sphi 0, %s20
    %p17 = scmp.ge.s32.totalorder %s16, 4
    %s26 = sphi 0, %s28
    %s29 = sphi 0, %s26
    %s30 = sphi 0, %s29
    %s46 = sphi 0, %s30
    %s50 = sphi 0, %s50
    %s52 = sphi 0, %s50
    %s53 = sphi 0, %s52
    %s67 = sphi 0, %s53
    %s71 = sphi 0, %s71
    %s73 = sphi 0, %s71
    %s74 = sphi 0, %s73
    %s88 = sphi 0, %s74
    %s92 = sphi 0, %s92
    %s94 = sphi 0, %s92
    %s95 = sphi 0, %s94
    %s109 = sphi 0, %s95
    %s113 = sphi 0, %s113
    %s115 = sphi 0, %s113
    %s116 = sphi 0, %s115
    %s130 = sphi 0, %s116
    %s134 = sphi 0, %s134
    %s136 = sphi 0, %s134
    %s137 = sphi 0, %s136
    %s151 = sphi 0, %s137
    %s155 = sphi 0, %s155
    %s157 = sphi 0, %s155
    %s158 = sphi 0, %s157
    %s172 = sphi 0, %s158
    %s176 = sphi 0, %s176
    %s178 = sphi 0, %s176
    %s179 = sphi 0, %s178
    %s193 = sphi 0, %s179
    %s199 = sphi 0, %s201
    %s202 = sphi 0, %s199
    %s203 = sphi 0, %s202
    %s219 = sphi 0, %s203
    %s225 = sphi 0, %s227
    %s228 = sphi 0, %s225
    %s229 = sphi 0, %s228
    %s245 = sphi 0, %s229
  $region4: #{shuffle_unit_forward.4} parent=0 // loop_header_branch
    %19 = sbr.rel (%p17) target = $region8
  $region5: #{shuffle_unit_forward.4} parent=0 // loop_body
    %s21 = ssub.s32 %s16, 1
    %s22 = ssub.s32 %s16, 2
    %s23 = sadd.s32 %s16, 1
    %s24 = ssub.s32 %s16, %s23
    %p25 = scmp.eq.s32.totalorder %s24, 0
    %s27 = sadd.s32 %s26, 1
    %s28 = scalar_select %p25, %s26, %s27
    %p31 = pneg %p25
    %p32 = scmp.eq.s32.totalorder %s16, 1
    %p33 = por %p31, %p32
    %p34 = scmp.ne.s32.totalorder %s26, %s29
    %p35 = scmp.eq.s32.totalorder %s16, 0
    %p36 = por %p34, %p35
    %p37 = scmp.ne.s32.totalorder %s26, %s29
    %p38 = scmp.eq.s32.totalorder %s21, 1
    %p39 = por %p37, %p38
    %p40 = scmp.ne.s32.totalorder %s29, %s30
    %p41 = scmp.eq.s32.totalorder %s21, 0
    %p42 = por %p40, %p41
    %p43 = scmp.ne.s32.totalorder %s29, %s30
    %p44 = scmp.eq.s32.totalorder %s22, 1
    %p45 = por %p43, %p44
    %p47 = scmp.ne.s32.totalorder %s30, %s46
    %p48 = scmp.eq.s32.totalorder %s22, 0
    %p49 = por %p47, %p48
    %s51 = sadd.s32 %s50, 1
    %p54 = scmp.eq.s32.totalorder %s16, 1
    %p55 = scmp.ne.s32.totalorder %s50, %s52
    %p56 = scmp.eq.s32.totalorder %s16, 0
    %p57 = por %p55, %p56
    %p58 = scmp.ne.s32.totalorder %s50, %s52
    %p59 = scmp.eq.s32.totalorder %s21, 1
    %p60 = por %p58, %p59
    %p61 = scmp.ne.s32.totalorder %s52, %s53
    %p62 = scmp.eq.s32.totalorder %s21, 0
    %p63 = por %p61, %p62
    %p64 = scmp.ne.s32.totalorder %s52, %s53
    %p65 = scmp.eq.s32.totalorder %s22, 1
    %p66 = por %p64, %p65
    %p68 = scmp.ne.s32.totalorder %s53, %s67
    %p69 = scmp.eq.s32.totalorder %s22, 0
    %p70 = por %p68, %p69
    %s72 = sadd.s32 %s71, 1
    %p75 = scmp.eq.s32.totalorder %s16, 1
    %p76 = scmp.ne.s32.totalorder %s71, %s73
    %p77 = scmp.eq.s32.totalorder %s16, 0
    %p78 = por %p76, %p77
    %p79 = scmp.ne.s32.totalorder %s71, %s73
    %p80 = scmp.eq.s32.totalorder %s21, 1
    %p81 = por %p79, %p80
    %p82 = scmp.ne.s32.totalorder %s73, %s74
    %p83 = scmp.eq.s32.totalorder %s21, 0
    %p84 = por %p82, %p83
    %p85 = scmp.ne.s32.totalorder %s73, %s74
    %p86 = scmp.eq.s32.totalorder %s22, 1
    %p87 = por %p85, %p86
    %p89 = scmp.ne.s32.totalorder %s74, %s88
    %p90 = scmp.eq.s32.totalorder %s22, 0
    %p91 = por %p89, %p90
    %s93 = sadd.s32 %s92, 1
    %p96 = scmp.eq.s32.totalorder %s16, 1
    %p97 = scmp.ne.s32.totalorder %s92, %s94
    %p98 = scmp.eq.s32.totalorder %s16, 0
    %p99 = por %p97, %p98
    %p100 = scmp.ne.s32.totalorder %s92, %s94
    %p101 = scmp.eq.s32.totalorder %s21, 1
    %p102 = por %p100, %p101
    %p103 = scmp.ne.s32.totalorder %s94, %s95
    %p104 = scmp.eq.s32.totalorder %s21, 0
    %p105 = por %p103, %p104
    %p106 = scmp.ne.s32.totalorder %s94, %s95
    %p107 = scmp.eq.s32.totalorder %s22, 1
    %p108 = por %p106, %p107
    %p110 = scmp.ne.s32.totalorder %s95, %s109
    %p111 = scmp.eq.s32.totalorder %s22, 0
    %p112 = por %p110, %p111
    %s114 = sadd.s32 %s113, 1
    %p117 = scmp.eq.s32.totalorder %s16, 1
    %p118 = scmp.ne.s32.totalorder %s113, %s115
    %p119 = scmp.eq.s32.totalorder %s16, 0
    %p120 = por %p118, %p119
    %p121 = scmp.ne.s32.totalorder %s113, %s115
    %p122 = scmp.eq.s32.totalorder %s21, 1
    %p123 = por %p121, %p122
    %p124 = scmp.ne.s32.totalorder %s115, %s116
    %p125 = scmp.eq.s32.totalorder %s21, 0
    %p126 = por %p124, %p125
    %p127 = scmp.ne.s32.totalorder %s115, %s116
    %p128 = scmp.eq.s32.totalorder %s22, 1
    %p129 = por %p127, %p128
    %p131 = scmp.ne.s32.totalorder %s116, %s130
    %p132 = scmp.eq.s32.totalorder %s22, 0
    %p133 = por %p131, %p132
    %s135 = sadd.s32 %s134, 1
    %p138 = scmp.eq.s32.totalorder %s16, 1
    %p139 = scmp.ne.s32.totalorder %s134, %s136
    %p140 = scmp.eq.s32.totalorder %s16, 0
    %p141 = por %p139, %p140
    %p142 = scmp.ne.s32.totalorder %s134, %s136
    %p143 = scmp.eq.s32.totalorder %s21, 1
    %p144 = por %p142, %p143
    %p145 = scmp.ne.s32.totalorder %s136, %s137
    %p146 = scmp.eq.s32.totalorder %s21, 0
    %p147 = por %p145, %p146
    %p148 = scmp.ne.s32.totalorder %s136, %s137
    %p149 = scmp.eq.s32.totalorder %s22, 1
    %p150 = por %p148, %p149
    %p152 = scmp.ne.s32.totalorder %s137, %s151
    %p153 = scmp.eq.s32.totalorder %s22, 0
    %p154 = por %p152, %p153
    %s156 = sadd.s32 %s155, 1
    %p159 = scmp.eq.s32.totalorder %s16, 1
    %p160 = scmp.ne.s32.totalorder %s155, %s157
    %p161 = scmp.eq.s32.totalorder %s16, 0
    %p162 = por %p160, %p161
    %p163 = scmp.ne.s32.totalorder %s155, %s157
    %p164 = scmp.eq.s32.totalorder %s21, 1
    %p165 = por %p163, %p164
    %p166 = scmp.ne.s32.totalorder %s157, %s158
    %p167 = scmp.eq.s32.totalorder %s21, 0
    %p168 = por %p166, %p167
    %p169 = scmp.ne.s32.totalorder %s157, %s158
    %p170 = scmp.eq.s32.totalorder %s22, 1
    %p171 = por %p169, %p170
    %p173 = scmp.ne.s32.totalorder %s158, %s172
    %p174 = scmp.eq.s32.totalorder %s22, 0
    %p175 = por %p173, %p174
    %s177 = sadd.s32 %s176, 1
    %p180 = scmp.eq.s32.totalorder %s16, 1
    %p181 = scmp.ne.s32.totalorder %s176, %s178
    %p182 = scmp.eq.s32.totalorder %s16, 0
    %p183 = por %p181, %p182
    %p184 = scmp.ne.s32.totalorder %s176, %s178
    %p185 = scmp.eq.s32.totalorder %s21, 1
    %p186 = por %p184, %p185
    %p187 = scmp.ne.s32.totalorder %s178, %s179
    %p188 = scmp.eq.s32.totalorder %s21, 0
    %p189 = por %p187, %p188
    %p190 = scmp.ne.s32.totalorder %s178, %s179
    %p191 = scmp.eq.s32.totalorder %s22, 1
    %p192 = por %p190, %p191
    %p194 = scmp.ne.s32.totalorder %s179, %s193
    %p195 = scmp.eq.s32.totalorder %s22, 0
    %p196 = por %p194, %p195
    %s197 = ssub.s32 %s16, %s23
    %p198 = scmp.eq.s32.totalorder %s197, 0
    %s200 = sadd.s32 %s199, 1
    %s201 = scalar_select %p198, %s199, %s200
    %p204 = pneg %p198
    %p205 = scmp.eq.s32.totalorder %s16, 1
    %p206 = por %p204, %p205
    %p207 = scmp.ne.s32.totalorder %s199, %s202
    %p208 = scmp.eq.s32.totalorder %s16, 0
    %p209 = por %p207, %p208
    %p210 = scmp.ne.s32.totalorder %s199, %s202
    %p211 = scmp.eq.s32.totalorder %s21, 1
    %p212 = por %p210, %p211
    %p213 = scmp.ne.s32.totalorder %s202, %s203
    %p214 = scmp.eq.s32.totalorder %s21, 0
    %p215 = por %p213, %p214
    %p216 = scmp.ne.s32.totalorder %s202, %s203
    %p217 = scmp.eq.s32.totalorder %s22, 1
    %p218 = por %p216, %p217
    %p220 = scmp.ne.s32.totalorder %s203, %s219
    %p221 = scmp.eq.s32.totalorder %s22, 0
    %p222 = por %p220, %p221
    %s223 = ssub.s32 %s16, %s23
    %p224 = scmp.eq.s32.totalorder %s223, 0
    %s226 = sadd.s32 %s225, 1
    %s227 = scalar_select %p224, %s225, %s226
    %p230 = pneg %p224
    %p231 = scmp.eq.s32.totalorder %s16, 1
    %p232 = por %p230, %p231
    %p233 = scmp.ne.s32.totalorder %s225, %s228
    %p234 = scmp.eq.s32.totalorder %s16, 0
    %p235 = por %p233, %p234
    %p236 = scmp.ne.s32.totalorder %s225, %s228
    %p237 = scmp.eq.s32.totalorder %s21, 1
    %p238 = por %p236, %p237
    %p239 = scmp.ne.s32.totalorder %s228, %s229
    %p240 = scmp.eq.s32.totalorder %s21, 0
    %p241 = por %p239, %p240
    %p242 = scmp.ne.s32.totalorder %s228, %s229
    %p243 = scmp.eq.s32.totalorder %s22, 1
    %p244 = por %p242, %p243
    %p246 = scmp.ne.s32.totalorder %s229, %s245
    %p247 = scmp.eq.s32.totalorder %s22, 0
    %p248 = por %p246, %p247
    %p249 = scmp.le.s32.totalorder 1, %s16
    %p250 = scmp.lt.s32.totalorder %s16, 3
    %p251 = pnand %p249, %p250
    %p252 = pneg %p251
    // Predicated region
    $region9: #{shuffle_unit_forward.4} parent=5 // pred_check
      _
    $region10: #{shuffle_unit_forward.4} parent=5 // pred_check_branch
      %254 = sbr.rel (%p251) target = $region12
    $region11: #{shuffle_unit_forward.4} parent=5 // pred_region
      %s255 = ssub.s32 %s16, 1
      // Predicated region
      $region13: #{shuffle_unit_forward.4} parent=11 // pred_check
        %p256 = pneg %p63
      $region14: #{shuffle_unit_forward.4} parent=11 // pred_check_branch
        %258 = sbr.rel (%p256) target = $region16
      $region15: #{shuffle_unit_forward.4} parent=11 // pred_region
        _
      $region16: #{shuffle_unit_forward.4} parent=11 // pred_fallthru
        _
      // Predicated region
      $region17: #{shuffle_unit_forward.4} parent=11 // pred_check
        %p259 = pneg %p84
      $region18: #{shuffle_unit_forward.4} parent=11 // pred_check_branch
        %261 = sbr.rel (%p259) target = $region20
      $region19: #{shuffle_unit_forward.4} parent=11 // pred_region
        _
      $region20: #{shuffle_unit_forward.4} parent=11 // pred_fallthru
        _
      // Predicated region
      $region21: #{shuffle_unit_forward.4} parent=11 // pred_check
        %p262 = pneg %p105
      $region22: #{shuffle_unit_forward.4} parent=11 // pred_check_branch
        %264 = sbr.rel (%p262) target = $region24
      $region23: #{shuffle_unit_forward.4} parent=11 // pred_region
        _
      $region24: #{shuffle_unit_forward.4} parent=11 // pred_fallthru
        _
      // Predicated region
      $region25: #{shuffle_unit_forward.4} parent=11 // pred_check
        %p265 = pneg %p126
      $region26: #{shuffle_unit_forward.4} parent=11 // pred_check_branch
        %267 = sbr.rel (%p265) target = $region28
      $region27: #{shuffle_unit_forward.4} parent=11 // pred_region
        _
      $region28: #{shuffle_unit_forward.4} parent=11 // pred_fallthru
        _
      // Predicated region
      $region29: #{shuffle_unit_forward.4} parent=11 // pred_check
        %p268 = pneg %p147
      $region30: #{shuffle_unit_forward.4} parent=11 // pred_check_branch
        %270 = sbr.rel (%p268) target = $region32
      $region31: #{shuffle_unit_forward.4} parent=11 // pred_region
        _
      $region32: #{shuffle_unit_forward.4} parent=11 // pred_fallthru
        _
      // Predicated region
      $region33: #{shuffle_unit_forward.4} parent=11 // pred_check
        %p271 = pneg %p168
      $region34: #{shuffle_unit_forward.4} parent=11 // pred_check_branch
        %273 = sbr.rel (%p271) target = $region36
      $region35: #{shuffle_unit_forward.4} parent=11 // pred_region
        _
      $region36: #{shuffle_unit_forward.4} parent=11 // pred_fallthru
        _
      // Predicated region
      $region37: #{shuffle_unit_forward.4} parent=11 // pred_check
        %p274 = pneg %p189
      $region38: #{shuffle_unit_forward.4} parent=11 // pred_check_branch
        %276 = sbr.rel (%p274) target = $region40
      $region39: #{shuffle_unit_forward.4} parent=11 // pred_region
        _
      $region40: #{shuffle_unit_forward.4} parent=11 // pred_fallthru
        _
    $region12: #{shuffle_unit_forward.4} parent=5 // pred_fallthru
      _
    %p277 = scmp.lt.s32.totalorder %s16, 2
    // Predicated region
    $region41: #{shuffle_unit_forward.4} parent=5 // pred_check
      %p278 = pneg %p277
    $region42: #{shuffle_unit_forward.4} parent=5 // pred_check_branch
      %280 = sbr.rel (%p278) target = $region44
    $region43: #{shuffle_unit_forward.4} parent=5 // pred_region
      // Predicated region
      $region45: #{shuffle_unit_forward.4} parent=43 // pred_check
        %p281 = pneg %p36
      $region46: #{shuffle_unit_forward.4} parent=43 // pred_check_branch
        %283 = sbr.rel (%p281) target = $region48
      $region47: #{shuffle_unit_forward.4} parent=43 // pred_region
        %s284 = smul.u32 2, %s16
        %p285 = scmp.lt.s32.totalorder %s284, 3
        %s286 = scalar_select %p285, %s284, 3
        %s287 = smul.addr %s286, 4
        %s288 = scalar_lea.vmem %s0, %s287
        %s289 = smul.u32 2, %s16
      $region48: #{shuffle_unit_forward.4} parent=43 // pred_fallthru
        _
    $region44: #{shuffle_unit_forward.4} parent=5 // pred_fallthru
      _
    %p290 = scmp.le.s32.totalorder 1, %s16
    %p291 = scmp.lt.s32.totalorder %s16, 3
    %p292 = pnand %p290, %p291
    %p293 = pneg %p292
    // Predicated region
    $region49: #{shuffle_unit_forward.4} parent=5 // pred_check
      _
    $region50: #{shuffle_unit_forward.4} parent=5 // pred_check_branch
      %295 = sbr.rel (%p292) target = $region52
    $region51: #{shuffle_unit_forward.4} parent=5 // pred_region
      %s296 = ssub.s32 %s16, 1
      %s297 = smul.u32 2, %s21
      %p298 = scmp.lt.s32.totalorder %s297, 3
      %s299 = scalar_select %p298, %s297, 3
      %s300 = smul.addr %s299, 4
      %s301 = scalar_lea.vmem %s0, %s300
      %p302 = pneg %p42
      %p303 = pneg %p39
      %p304 = pneg %p63
      %p305 = pneg %p60
      %p306 = pneg %p84
      %p307 = pneg %p81
      %p308 = pneg %p105
      %p309 = pneg %p102
      %p310 = pneg %p126
      %p311 = pneg %p123
      %p312 = pneg %p147
      %p313 = pneg %p144
      %p314 = pneg %p168
      %p315 = pneg %p165
      %p316 = pneg %p189
      %p317 = pneg %p186
      %p318 = pneg %p215
      %p319 = pneg %p212
      %s320 = smul.u32 2, %s21
      %p321 = scmp.lt.s32.totalorder %s320, 3
      %s322 = scalar_select %p321, %s320, 3
      %s323 = smul.addr %s322, 8
      %s324 = scalar_lea.vmem %s8, %s323
      %p325 = pneg %p241
      %p326 = pneg %p238
      %p327 = scmp.lt.s32.totalorder %s21, 1
      %s328 = scalar_select %p327, %s21, 1
      %s329 = smul.addr %s328, 8
      %s330 = scalar_lea.vmem %s9, %s329
      %s331 = smul.u32 2, %s21
      %p332 = scmp.lt.s32.totalorder %s331, 3
      %s333 = scalar_select %p332, %s331, 3
      %s334 = smul.addr %s333, 4
      %s335 = scalar_lea.vmem %s0, %s334
      %s336 = smul.u32 2, %s21
      %s337 = smul.u32 2, %s21
      %p338 = scmp.lt.s32.totalorder %s337, 3
      %s339 = scalar_select %p338, %s337, 3
      %s340 = smul.addr %s339, 8
      %s341 = scalar_lea.vmem %s8, %s340
      %s342 = smul.u32 2, %s21
      %p343 = scmp.lt.s32.totalorder %s21, 1
      %s344 = scalar_select %p343, %s21, 1
      %s345 = smul.addr %s344, 8
      %s346 = scalar_lea.vmem %s9, %s345
      %v347 = vld [vmem:[%s1] sm:$0xf]
      %v348 = vld [vmem:[%s335] sm:$0xff]
      %v349 = vld [vmem:[%s2] sm:$0xf]
      %351 = vset.pattern.permute.xlu0 0
      %352 = vperm.xlu0 %351, %v349
      %v353 = vpop.permute.xlu0 %352
      %v356 = vcombine.high %v348, %v348
      %vm357 = vcmask 31744
      %v359 = vsel %vm357, %v347, 0
      %vm361 = vcmask 1043456
      %v362 = vsel %vm361, %v348, 0
      %v364 = vsel %vm361, %v356, 0
      %366 = vmatprep.subr.mxu0 %v364
      %367 = vmatpush1.msra.mxu0 %v362
      %368 = vmatprep.subr.mxu0 0.0
      %369 = vmatpush1.msra.mxu0 0.0
      %370 = vmatprep.subr.mxu0 0.0
      %371 = vmatpush1.msra.mxu0 0.0
      %372 = vmatprep.subr.mxu0 0.0
      %373 = vmatpush1.msra.mxu0 0.0
      %374 = vmatprep.subr.mxu0 0.0
      %375 = vmatpush1.msra.mxu0 0.0
      %376 = vmatprep.subr.mxu0 0.0
      %377 = vmatpush1.msra.mxu0 0.0
      %378 = vmatprep.subr.mxu0 0.0
      %379 = vmatpush1.msra.mxu0 0.0
      %380 = vmatprep.subr.mxu0 0.0
      %381 = vmatpush1.msra.mxu0 0.0
      %382 = vmatprep.subr.mxu0 0.0
      %383 = vmatpush1.msra.mxu0 0.0
      %384 = vmatprep.subr.mxu0 0.0
      %385 = vmatpush1.msra.mxu0 0.0
      %386 = vmatprep.subr.mxu0 0.0
      %387 = vmatpush1.msra.mxu0 0.0
      %388 = vmatprep.subr.mxu0 0.0
      %389 = vmatpush1.msra.mxu0 0.0
      %390 = vmatprep.subr.mxu0 0.0
      %391 = vmatpush1.msra.mxu0 0.0
      %392 = vmatprep.subr.mxu0 0.0
      %393 = vmatpush1.msra.mxu0 0.0
      %394 = vmatprep.subr.mxu0 0.0
      %395 = vmatpush1.msra.mxu0 0.0
      %396 = vmatprep.subr.mxu0 0.0
      %397 = vmatpush1.msra.mxu0 0.0
      %398 = vmatprep.subr.mxu0 0.0
      %399 = vmatpush1.msra.mxu0 0.0
      %400 = vmatprep.subr.mxu0 0.0
      %401 = vmatpush1.msra.mxu0 0.0
      %402 = vmatprep.subr.mxu0 0.0
      %403 = vmatpush1.msra.mxu0 0.0
      %404 = vmatprep.subr.mxu0 0.0
      %405 = vmatpush1.msra.mxu0 0.0
      %406 = vmatprep.subr.mxu0 0.0
      %407 = vmatpush1.msra.mxu0 0.0
      %408 = vmatprep.subr.mxu0 0.0
      %409 = vmatpush1.msra.mxu0 0.0
      %410 = vmatprep.subr.mxu0 0.0
      %411 = vmatpush1.msra.mxu0 0.0
      %412 = vmatprep.subr.mxu0 0.0
      %413 = vmatpush1.msra.mxu0 0.0
      %414 = vmatprep.subr.mxu0 0.0
      %415 = vmatpush1.msra.mxu0 0.0
      %416 = vmatprep.subr.mxu0 0.0
      %417 = vmatpush1.msra.mxu0 0.0
      %418 = vmatprep.subr.mxu0 0.0
      %419 = vmatpush1.msra.mxu0 0.0
      %420 = vmatprep.subr.mxu0 0.0
      %421 = vmatpush1.msra.mxu0 0.0
      %422 = vmatprep.subr.mxu0 0.0
      %423 = vmatpush1.msra.mxu0 0.0
      %424 = vmatprep.subr.mxu0 0.0
      %425 = vmatpush1.msra.mxu0 0.0
      %426 = vmatprep.subr.mxu0 0.0
      %427 = vmatpush1.msra.mxu0 0.0
      %428 = vmatprep.subr.mxu0 0.0
      %429 = vmatpush1.msra.mxu0 0.0
      %430 = vmatprep.mubr.f32.mxu0 0.0
      %431 = vmatmul.mubr.f32.gmra.mrb[0].mxu0 %v359
      %v432 = vpop.f32.mrb[0].mxu0
      %v433 = vadd.f32 %v353, %v432
      %v434 = vpop.f32.mrb[0].mxu0
      %v435 = vadd.f32 %v353, %v434
      %436 = vdwg.mxu0
      %v437 = vld [vmem:[%s3] sm:$0xf]
      %439 = vset.pattern.permute.xlu0 0
      %440 = vperm.xlu0 %439, %v437
      %v441 = vpop.permute.xlu0 %440
      %v443 = vmul.f32 %v433, %v441
      %v444 = vmul.f32 %v435, %v441
      %v445 = vld [vmem:[%s4] sm:$0xf]
      %447 = vset.pattern.permute.xlu0 0
      %448 = vperm.xlu0 %447, %v445
      %v449 = vpop.permute.xlu0 %448
      %v451 = vadd.f32 %v443, %v449
      %v452 = vadd.f32 %v444, %v449
      %v453 = vmax.f32 %v451, 0.0
      %v454 = vmax.f32 %v452, 0.0
      %v455 = vld [vmem:[%s5] ss:$2 sm:$0x3]
      %s456 = scalar_lea.vmem %s5, 1
      %v457 = vld [vmem:[%s456] ss:$2 sm:$0x3]
      %vm458 = vcmp.ge.f32.partialorder %v455, 1.0
      %vm459 = vcmp.lt.f32.partialorder %v455, 15.0
      %vm460 = vcmp.ge.f32.partialorder %v457, 1.0
      %vm461 = vcmp.lt.f32.partialorder %v457, 15.0
      %462 = vrot.lane.b32.xlu0 %v453, 17
      %v463 = vpop.permute.xlu0 %462
      %464 = vrot.lane.b32.xlu0 %v454, 17
      %v465 = vpop.permute.xlu0 %464
      %v466 = vlaneseq
      %v467 = vand.u32 %v466, 127
      %vm468 = vcmp.lt.s32.totalorder %v467, 17
      %v469 = vsel %vm468, %v463, %v465
      %v470 = vsel %vm468, %v465, %v463
      %vm471 = vmand %vm458, %vm460
      %v472 = vsel %vm471, 1, 0
      %v473 = vlaneseq
      %v474 = vshrl.u32 %v473, 7
      %v475 = vsub.s32 0, %v474
      %v476 = vrot.slane %v472, %v475
      %v477 = vlaneseq
      %v478 = vshrl.u32 %v477, 7
      %v479 = vsub.s32 1, %v478
      %v480 = vrot.slane %v472, %v479
      %vm481 = vcmp.eq.s32.totalorder %v476, 1
      %vm482 = vcmp.eq.s32.totalorder %v480, 1
      %v483 = vsel %vm481, %v470, 0.0
      %v484 = vsel %vm482, %v469, 0.0
      %v485 = vld [vmem:[%s6] sm:$0xff]
      %486 = vrot.lane.b32.xlu0 %v453, 16
      %v487 = vpop.permute.xlu0 %486
      %488 = vrot.lane.b32.xlu0 %v454, 16
      %v489 = vpop.permute.xlu0 %488
      %vm490 = vcmp.lt.s32.totalorder %v467, 16
      %v491 = vsel %vm490, %v487, %v489
      %v492 = vsel %vm490, %v489, %v487
      %v493 = vsel %vm458, 1, 0
      %v494 = vlaneseq
      %v495 = vshrl.u32 %v494, 7
      %v496 = vsub.s32 0, %v495
      %v497 = vrot.slane %v493, %v496
      %v498 = vlaneseq
      %v499 = vshrl.u32 %v498, 7
      %v500 = vsub.s32 1, %v499
      %v501 = vrot.slane %v493, %v500
      %vm502 = vcmp.eq.s32.totalorder %v497, 1
      %vm503 = vcmp.eq.s32.totalorder %v501, 1
      %v504 = vsel %vm502, %v492, 0.0
      %v505 = vsel %vm503, %v491, 0.0
      %507 = vrot.lane.b32.xlu0 %v485, 124
      %v508 = vpop.permute.xlu0 %507
      %v509 = vsel %vm357, %v508, 0
      %v512 = vsel %vm361, %v504, 0
      %v515 = vsel %vm361, %v505, 0
      %517 = vmatprep.subr.mxu0 %v515
      %518 = vmatpush1.msra.mxu0 %v512
      %519 = vmatprep.subr.mxu0 0.0
      %520 = vmatpush1.msra.mxu0 0.0
      %521 = vmatprep.subr.mxu0 0.0
      %522 = vmatpush1.msra.mxu0 0.0
      %523 = vmatprep.subr.mxu0 0.0
      %524 = vmatpush1.msra.mxu0 0.0
      %525 = vmatprep.subr.mxu0 0.0
      %526 = vmatpush1.msra.mxu0 0.0
      %527 = vmatprep.subr.mxu0 0.0
      %528 = vmatpush1.msra.mxu0 0.0
      %529 = vmatprep.subr.mxu0 0.0
      %530 = vmatpush1.msra.mxu0 0.0
      %531 = vmatprep.subr.mxu0 0.0
      %532 = vmatpush1.msra.mxu0 0.0
      %533 = vmatprep.subr.mxu0 0.0
      %534 = vmatpush1.msra.mxu0 0.0
      %535 = vmatprep.subr.mxu0 0.0
      %536 = vmatpush1.msra.mxu0 0.0
      %537 = vmatprep.subr.mxu0 0.0
      %538 = vmatpush1.msra.mxu0 0.0
      %539 = vmatprep.subr.mxu0 0.0
      %540 = vmatpush1.msra.mxu0 0.0
      %541 = vmatprep.subr.mxu0 0.0
      %542 = vmatpush1.msra.mxu0 0.0
      %543 = vmatprep.subr.mxu0 0.0
      %544 = vmatpush1.msra.mxu0 0.0
      %545 = vmatprep.subr.mxu0 0.0
      %546 = vmatpush1.msra.mxu0 0.0
      %547 = vmatprep.subr.mxu0 0.0
      %548 = vmatpush1.msra.mxu0 0.0
      %549 = vmatprep.subr.mxu0 0.0
      %550 = vmatpush1.msra.mxu0 0.0
      %551 = vmatprep.subr.mxu0 0.0
      %552 = vmatpush1.msra.mxu0 0.0
      %553 = vmatprep.subr.mxu0 0.0
      %554 = vmatpush1.msra.mxu0 0.0
      %555 = vmatprep.subr.mxu0 0.0
      %556 = vmatpush1.msra.mxu0 0.0
      %557 = vmatprep.subr.mxu0 0.0
      %558 = vmatpush1.msra.mxu0 0.0
      %559 = vmatprep.subr.mxu0 0.0
      %560 = vmatpush1.msra.mxu0 0.0
      %561 = vmatprep.subr.mxu0 0.0
      %562 = vmatpush1.msra.mxu0 0.0
      %563 = vmatprep.subr.mxu0 0.0
      %564 = vmatpush1.msra.mxu0 0.0
      %565 = vmatprep.subr.mxu0 0.0
      %566 = vmatpush1.msra.mxu0 0.0
      %567 = vmatprep.subr.mxu0 0.0
      %568 = vmatpush1.msra.mxu0 0.0
      %569 = vmatprep.subr.mxu0 0.0
      %570 = vmatpush1.msra.mxu0 0.0
      %571 = vmatprep.subr.mxu0 0.0
      %572 = vmatpush1.msra.mxu0 0.0
      %573 = vmatprep.subr.mxu0 0.0
      %574 = vmatpush1.msra.mxu0 0.0
      %575 = vmatprep.subr.mxu0 0.0
      %576 = vmatpush1.msra.mxu0 0.0
      %577 = vmatprep.subr.mxu0 0.0
      %578 = vmatpush1.msra.mxu0 0.0
      %579 = vmatprep.subr.mxu0 0.0
      %580 = vmatpush1.msra.mxu0 0.0
      %581 = vmatprep.mubr.f32.mxu0 0.0
      %582 = vmatmul.mubr.f32.gmra.mrb[0].mxu0 %v509
      %v583 = vpop.f32.mrb[0].mxu0
      %v584 = vadd.f32 0.0, %v583
      %v585 = vpop.f32.mrb[0].mxu0
      %v586 = vadd.f32 0.0, %v585
      %587 = vdwg.mxu0
      %v588 = vsel %vm357, %v485, 0
      %v591 = vsel %vm361, %v483, 0
      %v594 = vsel %vm361, %v484, 0
      %596 = vmatprep.subr.mxu0 %v594
      %597 = vmatpush1.msra.mxu0 %v591
      %598 = vmatprep.subr.mxu0 0.0
      %599 = vmatpush1.msra.mxu0 0.0
      %600 = vmatprep.subr.mxu0 0.0
      %601 = vmatpush1.msra.mxu0 0.0
      %602 = vmatprep.subr.mxu0 0.0
      %603 = vmatpush1.msra.mxu0 0.0
      %604 = vmatprep.subr.mxu0 0.0
      %605 = vmatpush1.msra.mxu0 0.0
      %606 = vmatprep.subr.mxu0 0.0
      %607 = vmatpush1.msra.mxu0 0.0
      %608 = vmatprep.subr.mxu0 0.0
      %609 = vmatpush1.msra.mxu0 0.0
      %610 = vmatprep.subr.mxu0 0.0
      %611 = vmatpush1.msra.mxu0 0.0
      %612 = vmatprep.subr.mxu0 0.0
      %613 = vmatpush1.msra.mxu0 0.0
      %614 = vmatprep.subr.mxu0 0.0
      %615 = vmatpush1.msra.mxu0 0.0
      %616 = vmatprep.subr.mxu0 0.0
      %617 = vmatpush1.msra.mxu0 0.0
      %618 = vmatprep.subr.mxu0 0.0
      %619 = vmatpush1.msra.mxu0 0.0
      %620 = vmatprep.subr.mxu0 0.0
      %621 = vmatpush1.msra.mxu0 0.0
      %622 = vmatprep.subr.mxu0 0.0
      %623 = vmatpush1.msra.mxu0 0.0
      %624 = vmatprep.subr.mxu0 0.0
      %625 = vmatpush1.msra.mxu0 0.0
      %626 = vmatprep.subr.mxu0 0.0
      %627 = vmatpush1.msra.mxu0 0.0
      %628 = vmatprep.subr.mxu0 0.0
      %629 = vmatpush1.msra.mxu0 0.0
      %630 = vmatprep.subr.mxu0 0.0
      %631 = vmatpush1.msra.mxu0 0.0
      %632 = vmatprep.subr.mxu0 0.0
      %633 = vmatpush1.msra.mxu0 0.0
      %634 = vmatprep.subr.mxu0 0.0
      %635 = vmatpush1.msra.mxu0 0.0
      %636 = vmatprep.subr.mxu0 0.0
      %637 = vmatpush1.msra.mxu0 0.0
      %638 = vmatprep.subr.mxu0 0.0
      %639 = vmatpush1.msra.mxu0 0.0
      %640 = vmatprep.subr.mxu0 0.0
      %641 = vmatpush1.msra.mxu0 0.0
      %642 = vmatprep.subr.mxu0 0.0
      %643 = vmatpush1.msra.mxu0 0.0
      %644 = vmatprep.subr.mxu0 0.0
      %645 = vmatpush1.msra.mxu0 0.0
      %646 = vmatprep.subr.mxu0 0.0
      %647 = vmatpush1.msra.mxu0 0.0
      %648 = vmatprep.subr.mxu0 0.0
      %649 = vmatpush1.msra.mxu0 0.0
      %650 = vmatprep.subr.mxu0 0.0
      %651 = vmatpush1.msra.mxu0 0.0
      %652 = vmatprep.subr.mxu0 0.0
      %653 = vmatpush1.msra.mxu0 0.0
      %654 = vmatprep.subr.mxu0 0.0
      %655 = vmatpush1.msra.mxu0 0.0
      %656 = vmatprep.subr.mxu0 0.0
      %657 = vmatpush1.msra.mxu0 0.0
      %658 = vmatprep.subr.mxu0 0.0
      %659 = vmatpush1.msra.mxu0 0.0
      %660 = vmatprep.mubr.f32.mxu0 0.0
      %661 = vmatmul.mubr.f32.gmra.mrb[0].mxu0 %v588
      %v662 = vpop.f32.mrb[0].mxu0
      %v663 = vadd.f32 %v584, %v662
      %v664 = vpop.f32.mrb[0].mxu0
      %v665 = vadd.f32 %v586, %v664
      %666 = vdwg.mxu0
      %667 = vrot.lane.b32.xlu0 %v453, 15
      %v668 = vpop.permute.xlu0 %667
      %669 = vrot.lane.b32.xlu0 %v454, 15
      %v670 = vpop.permute.xlu0 %669
      %vm671 = vcmp.lt.s32.totalorder %v467, 15
      %v672 = vsel %vm671, %v668, %v670
      %v673 = vsel %vm671, %v670, %v668
      %vm674 = vmand %vm458, %vm461
      %v675 = vsel %vm674, 1, 0
      %v676 = vlaneseq
      %v677 = vshrl.u32 %v676, 7
      %v678 = vsub.s32 0, %v677
      %v679 = vrot.slane %v675, %v678
      %v680 = vlaneseq
      %v681 = vshrl.u32 %v680, 7
      %v682 = vsub.s32 1, %v681
      %v683 = vrot.slane %v675, %v682
      %vm684 = vcmp.eq.s32.totalorder %v679, 1
      %vm685 = vcmp.eq.s32.totalorder %v683, 1
      %v686 = vsel %vm684, %v673, 0.0
      %v687 = vsel %vm685, %v672, 0.0
      %688 = vrot.lane.b32.xlu0 %v485, 120
      %v689 = vpop.permute.xlu0 %688
      %v690 = vsel %vm357, %v689, 0
      %v693 = vsel %vm361, %v686, 0
      %v696 = vsel %vm361, %v687, 0
      %698 = vmatprep.subr.mxu0 %v696
      %699 = vmatpush1.msra.mxu0 %v693
      %700 = vmatprep.subr.mxu0 0.0
      %701 = vmatpush1.msra.mxu0 0.0
      %702 = vmatprep.subr.mxu0 0.0
      %703 = vmatpush1.msra.mxu0 0.0
      %704 = vmatprep.subr.mxu0 0.0
      %705 = vmatpush1.msra.mxu0 0.0
      %706 = vmatprep.subr.mxu0 0.0
      %707 = vmatpush1.msra.mxu0 0.0
      %708 = vmatprep.subr.mxu0 0.0
      %709 = vmatpush1.msra.mxu0 0.0
      %710 = vmatprep.subr.mxu0 0.0
      %711 = vmatpush1.msra.mxu0 0.0
      %712 = vmatprep.subr.mxu0 0.0
      %713 = vmatpush1.msra.mxu0 0.0
      %714 = vmatprep.subr.mxu0 0.0
      %715 = vmatpush1.msra.mxu0 0.0
      %716 = vmatprep.subr.mxu0 0.0
      %717 = vmatpush1.msra.mxu0 0.0
      %718 = vmatprep.subr.mxu0 0.0
      %719 = vmatpush1.msra.mxu0 0.0
      %720 = vmatprep.subr.mxu0 0.0
      %721 = vmatpush1.msra.mxu0 0.0
      %722 = vmatprep.subr.mxu0 0.0
      %723 = vmatpush1.msra.mxu0 0.0
      %724 = vmatprep.subr.mxu0 0.0
      %725 = vmatpush1.msra.mxu0 0.0
      %726 = vmatprep.subr.mxu0 0.0
      %727 = vmatpush1.msra.mxu0 0.0
      %728 = vmatprep.subr.mxu0 0.0
      %729 = vmatpush1.msra.mxu0 0.0
      %730 = vmatprep.subr.mxu0 0.0
      %731 = vmatpush1.msra.mxu0 0.0
      %732 = vmatprep.subr.mxu0 0.0
      %733 = vmatpush1.msra.mxu0 0.0
      %734 = vmatprep.subr.mxu0 0.0
      %735 = vmatpush1.msra.mxu0 0.0
      %736 = vmatprep.subr.mxu0 0.0
      %737 = vmatpush1.msra.mxu0 0.0
      %738 = vmatprep.subr.mxu0 0.0
      %739 = vmatpush1.msra.mxu0 0.0
      %740 = vmatprep.subr.mxu0 0.0
      %741 = vmatpush1.msra.mxu0 0.0
      %742 = vmatprep.subr.mxu0 0.0
      %743 = vmatpush1.msra.mxu0 0.0
      %744 = vmatprep.subr.mxu0 0.0
      %745 = vmatpush1.msra.mxu0 0.0
      %746 = vmatprep.subr.mxu0 0.0
      %747 = vmatpush1.msra.mxu0 0.0
      %748 = vmatprep.subr.mxu0 0.0
      %749 = vmatpush1.msra.mxu0 0.0
      %750 = vmatprep.subr.mxu0 0.0
      %751 = vmatpush1.msra.mxu0 0.0
      %752 = vmatprep.subr.mxu0 0.0
      %753 = vmatpush1.msra.mxu0 0.0
      %754 = vmatprep.subr.mxu0 0.0
      %755 = vmatpush1.msra.mxu0 0.0
      %756 = vmatprep.subr.mxu0 0.0
      %757 = vmatpush1.msra.mxu0 0.0
      %758 = vmatprep.subr.mxu0 0.0
      %759 = vmatpush1.msra.mxu0 0.0
      %760 = vmatprep.subr.mxu0 0.0
      %761 = vmatpush1.msra.mxu0 0.0
      %762 = vmatprep.mubr.f32.mxu0 0.0
      %763 = vmatmul.mubr.f32.gmra.mrb[0].mxu0 %v690
      %v764 = vpop.f32.mrb[0].mxu0
      %v765 = vadd.f32 0.0, %v764
      %v766 = vpop.f32.mrb[0].mxu0
      %v767 = vadd.f32 0.0, %v766
      %768 = vdwg.mxu0
      %v769 = vadd.f32 %v663, %v765
      %v770 = vadd.f32 %v665, %v767
      %771 = vrot.lane.b32.xlu0 %v453, 1
      %v772 = vpop.permute.xlu0 %771
      %773 = vrot.lane.b32.xlu0 %v454, 1
      %v774 = vpop.permute.xlu0 %773
      %vm775 = vcmp.lt.s32.totalorder %v467, 1
      %v776 = vsel %vm775, %v772, %v774
      %v777 = vsel %vm775, %v774, %v772
      %v778 = vsel %vm460, 1, 0
      %v779 = vlaneseq
      %v780 = vshrl.u32 %v779, 7
      %v781 = vsub.s32 0, %v780
      %v782 = vrot.slane %v778, %v781
      %v783 = vlaneseq
      %v784 = vshrl.u32 %v783, 7
      %v785 = vsub.s32 1, %v784
      %v786 = vrot.slane %v778, %v785
      %vm787 = vcmp.eq.s32.totalorder %v782, 1
      %vm788 = vcmp.eq.s32.totalorder %v786, 1
      %v789 = vsel %vm787, %v777, 0.0
      %v790 = vsel %vm788, %v776, 0.0
      %791 = vrot.lane.b32.xlu0 %v485, 116
      %v792 = vpop.permute.xlu0 %791
      %v793 = vsel %vm357, %v792, 0
      %v796 = vsel %vm361, %v789, 0
      %v799 = vsel %vm361, %v790, 0
      %801 = vmatprep.subr.mxu0 %v799
      %802 = vmatpush1.msra.mxu0 %v796
      %803 = vmatprep.subr.mxu0 0.0
      %804 = vmatpush1.msra.mxu0 0.0
      %805 = vmatprep.subr.mxu0 0.0
      %806 = vmatpush1.msra.mxu0 0.0
      %807 = vmatprep.subr.mxu0 0.0
      %808 = vmatpush1.msra.mxu0 0.0
      %809 = vmatprep.subr.mxu0 0.0
      %810 = vmatpush1.msra.mxu0 0.0
      %811 = vmatprep.subr.mxu0 0.0
      %812 = vmatpush1.msra.mxu0 0.0
      %813 = vmatprep.subr.mxu0 0.0
      %814 = vmatpush1.msra.mxu0 0.0
      %815 = vmatprep.subr.mxu0 0.0
      %816 = vmatpush1.msra.mxu0 0.0
      %817 = vmatprep.subr.mxu0 0.0
      %818 = vmatpush1.msra.mxu0 0.0
      %819 = vmatprep.subr.mxu0 0.0
      %820 = vmatpush1.msra.mxu0 0.0
      %821 = vmatprep.subr.mxu0 0.0
      %822 = vmatpush1.msra.mxu0 0.0
      %823 = vmatprep.subr.mxu0 0.0
      %824 = vmatpush1.msra.mxu0 0.0
      %825 = vmatprep.subr.mxu0 0.0
      %826 = vmatpush1.msra.mxu0 0.0
      %827 = vmatprep.subr.mxu0 0.0
      %828 = vmatpush1.msra.mxu0 0.0
      %829 = vmatprep.subr.mxu0 0.0
      %830 = vmatpush1.msra.mxu0 0.0
      %831 = vmatprep.subr.mxu0 0.0
      %832 = vmatpush1.msra.mxu0 0.0
      %833 = vmatprep.subr.mxu0 0.0
      %834 = vmatpush1.msra.mxu0 0.0
      %835 = vmatprep.subr.mxu0 0.0
      %836 = vmatpush1.msra.mxu0 0.0
      %837 = vmatprep.subr.mxu0 0.0
      %838 = vmatpush1.msra.mxu0 0.0
      %839 = vmatprep.subr.mxu0 0.0
      %840 = vmatpush1.msra.mxu0 0.0
      %841 = vmatprep.subr.mxu0 0.0
      %842 = vmatpush1.msra.mxu0 0.0
      %843 = vmatprep.subr.mxu0 0.0
      %844 = vmatpush1.msra.mxu0 0.0
      %845 = vmatprep.subr.mxu0 0.0
      %846 = vmatpush1.msra.mxu0 0.0
      %847 = vmatprep.subr.mxu0 0.0
      %848 = vmatpush1.msra.mxu0 0.0
      %849 = vmatprep.subr.mxu0 0.0
      %850 = vmatpush1.msra.mxu0 0.0
      %851 = vmatprep.subr.mxu0 0.0
      %852 = vmatpush1.msra.mxu0 0.0
      %853 = vmatprep.subr.mxu0 0.0
      %854 = vmatpush1.msra.mxu0 0.0
      %855 = vmatprep.subr.mxu0 0.0
      %856 = vmatpush1.msra.mxu0 0.0
      %857 = vmatprep.subr.mxu0 0.0
      %858 = vmatpush1.msra.mxu0 0.0
      %859 = vmatprep.subr.mxu0 0.0
      %860 = vmatpush1.msra.mxu0 0.0
      %861 = vmatprep.subr.mxu0 0.0
      %862 = vmatpush1.msra.mxu0 0.0
      %863 = vmatprep.subr.mxu0 0.0
      %864 = vmatpush1.msra.mxu0 0.0
      %865 = vmatprep.mubr.f32.mxu0 0.0
      %866 = vmatmul.mubr.f32.gmra.mrb[0].mxu0 %v793
      %v867 = vpop.f32.mrb[0].mxu0
      %v868 = vadd.f32 0.0, %v867
      %v869 = vpop.f32.mrb[0].mxu0
      %v870 = vadd.f32 0.0, %v869
      %871 = vdwg.mxu0
      %v872 = vadd.f32 %v769, %v868
      %v873 = vadd.f32 %v770, %v870
      %874 = vrot.lane.b32.xlu0 %v485, 112
      %v875 = vpop.permute.xlu0 %874
      %v876 = vsel %vm357, %v875, 0
      %v879 = vsel %vm361, %v453, 0
      %v882 = vsel %vm361, %v454, 0
      %884 = vmatprep.subr.mxu0 %v882
      %885 = vmatpush1.msra.mxu0 %v879
      %886 = vmatprep.subr.mxu0 0.0
      %887 = vmatpush1.msra.mxu0 0.0
      %888 = vmatprep.subr.mxu0 0.0
      %889 = vmatpush1.msra.mxu0 0.0
      %890 = vmatprep.subr.mxu0 0.0
      %891 = vmatpush1.msra.mxu0 0.0
      %892 = vmatprep.subr.mxu0 0.0
      %893 = vmatpush1.msra.mxu0 0.0
      %894 = vmatprep.subr.mxu0 0.0
      %895 = vmatpush1.msra.mxu0 0.0
      %896 = vmatprep.subr.mxu0 0.0
      %897 = vmatpush1.msra.mxu0 0.0
      %898 = vmatprep.subr.mxu0 0.0
      %899 = vmatpush1.msra.mxu0 0.0
      %900 = vmatprep.subr.mxu0 0.0
      %901 = vmatpush1.msra.mxu0 0.0
      %902 = vmatprep.subr.mxu0 0.0
      %903 = vmatpush1.msra.mxu0 0.0
      %904 = vmatprep.subr.mxu0 0.0
      %905 = vmatpush1.msra.mxu0 0.0
      %906 = vmatprep.subr.mxu0 0.0
      %907 = vmatpush1.msra.mxu0 0.0
      %908 = vmatprep.subr.mxu0 0.0
      %909 = vmatpush1.msra.mxu0 0.0
      %910 = vmatprep.subr.mxu0 0.0
      %911 = vmatpush1.msra.mxu0 0.0
      %912 = vmatprep.subr.mxu0 0.0
      %913 = vmatpush1.msra.mxu0 0.0
      %914 = vmatprep.subr.mxu0 0.0
      %915 = vmatpush1.msra.mxu0 0.0
      %916 = vmatprep.subr.mxu0 0.0
      %917 = vmatpush1.msra.mxu0 0.0
      %918 = vmatprep.subr.mxu0 0.0
      %919 = vmatpush1.msra.mxu0 0.0
      %920 = vmatprep.subr.mxu0 0.0
      %921 = vmatpush1.msra.mxu0 0.0
      %922 = vmatprep.subr.mxu0 0.0
      %923 = vmatpush1.msra.mxu0 0.0
      %924 = vmatprep.subr.mxu0 0.0
      %925 = vmatpush1.msra.mxu0 0.0
      %926 = vmatprep.subr.mxu0 0.0
      %927 = vmatpush1.msra.mxu0 0.0
      %928 = vmatprep.subr.mxu0 0.0
      %929 = vmatpush1.msra.mxu0 0.0
      %930 = vmatprep.subr.mxu0 0.0
      %931 = vmatpush1.msra.mxu0 0.0
      %932 = vmatprep.subr.mxu0 0.0
      %933 = vmatpush1.msra.mxu0 0.0
      %934 = vmatprep.subr.mxu0 0.0
      %935 = vmatpush1.msra.mxu0 0.0
      %936 = vmatprep.subr.mxu0 0.0
      %937 = vmatpush1.msra.mxu0 0.0
      %938 = vmatprep.subr.mxu0 0.0
      %939 = vmatpush1.msra.mxu0 0.0
      %940 = vmatprep.subr.mxu0 0.0
      %941 = vmatpush1.msra.mxu0 0.0
      %942 = vmatprep.subr.mxu0 0.0
      %943 = vmatpush1.msra.mxu0 0.0
      %944 = vmatprep.subr.mxu0 0.0
      %945 = vmatpush1.msra.mxu0 0.0
      %946 = vmatprep.subr.mxu0 0.0
      %947 = vmatpush1.msra.mxu0 0.0
      %948 = vmatprep.mubr.f32.mxu0 0.0
      %949 = vmatmul.mubr.f32.gmra.mrb[0].mxu0 %v876
      %v950 = vpop.f32.mrb[0].mxu0
      %v951 = vadd.f32 0.0, %v950
      %v952 = vpop.f32.mrb[0].mxu0
      %v953 = vadd.f32 0.0, %v952
      %954 = vdwg.mxu0
      %v955 = vadd.f32 %v872, %v951
      %v956 = vadd.f32 %v873, %v953
      %957 = vrot.lane.b32.xlu0 %v453, 127
      %v958 = vpop.permute.xlu0 %957
      %959 = vrot.lane.b32.xlu0 %v454, 127
      %v960 = vpop.permute.xlu0 %959
      %vm961 = vcmp.lt.s32.totalorder %v467, 127
      %v962 = vsel %vm961, %v958, %v960
      %v963 = vsel %vm961, %v960, %v958
      %v964 = vsel %vm461, 1, 0
      %v965 = vlaneseq
      %v966 = vshrl.u32 %v965, 7
      %v967 = vsub.s32 0, %v966
      %v968 = vrot.slane %v964, %v967
      %v969 = vlaneseq
      %v970 = vshrl.u32 %v969, 7
      %v971 = vsub.s32 1, %v970
      %v972 = vrot.slane %v964, %v971
      %vm973 = vcmp.eq.s32.totalorder %v968, 1
      %vm974 = vcmp.eq.s32.totalorder %v972, 1
      %v975 = vsel %vm973, %v962, 0.0
      %v976 = vsel %vm974, %v963, 0.0
      %977 = vrot.lane.b32.xlu0 %v485, 108
      %v978 = vpop.permute.xlu0 %977
      %v979 = vsel %vm357, %v978, 0
      %v982 = vsel %vm361, %v975, 0
      %v985 = vsel %vm361, %v976, 0
      %987 = vmatprep.subr.mxu0 %v985
      %988 = vmatpush1.msra.mxu0 %v982
      %989 = vmatprep.subr.mxu0 0.0
      %990 = vmatpush1.msra.mxu0 0.0
      %991 = vmatprep.subr.mxu0 0.0
      %992 = vmatpush1.msra.mxu0 0.0
      %993 = vmatprep.subr.mxu0 0.0
      %994 = vmatpush1.msra.mxu0 0.0
      %995 = vmatprep.subr.mxu0 0.0
      %996 = vmatpush1.msra.mxu0 0.0
      %997 = vmatprep.subr.mxu0 0.0
      %998 = vmatpush1.msra.mxu0 0.0
      %999 = vmatprep.subr.mxu0 0.0
      %1000 = vmatpush1.msra.mxu0 0.0
      %1001 = vmatprep.subr.mxu0 0.0
      %1002 = vmatpush1.msra.mxu0 0.0
      %1003 = vmatprep.subr.mxu0 0.0
      %1004 = vmatpush1.msra.mxu0 0.0
      %1005 = vmatprep.subr.mxu0 0.0
      %1006 = vmatpush1.msra.mxu0 0.0
      %1007 = vmatprep.subr.mxu0 0.0
      %1008 = vmatpush1.msra.mxu0 0.0
      %1009 = vmatprep.subr.mxu0 0.0
      %1010 = vmatpush1.msra.mxu0 0.0
      %1011 = vmatprep.subr.mxu0 0.0
      %1012 = vmatpush1.msra.mxu0 0.0
      %1013 = vmatprep.subr.mxu0 0.0
      %1014 = vmatpush1.msra.mxu0 0.0
      %1015 = vmatprep.subr.mxu0 0.0
      %1016 = vmatpush1.msra.mxu0 0.0
      %1017 = vmatprep.subr.mxu0 0.0
      %1018 = vmatpush1.msra.mxu0 0.0
      %1019 = vmatprep.subr.mxu0 0.0
      %1020 = vmatpush1.msra.mxu0 0.0
      %1021 = vmatprep.subr.mxu0 0.0
      %1022 = vmatpush1.msra.mxu0 0.0
      %1023 = vmatprep.subr.mxu0 0.0
      %1024 = vmatpush1.msra.mxu0 0.0
      %1025 = vmatprep.subr.mxu0 0.0
      %1026 = vmatpush1.msra.mxu0 0.0
      %1027 = vmatprep.subr.mxu0 0.0
      %1028 = vmatpush1.msra.mxu0 0.0
      %1029 = vmatprep.subr.mxu0 0.0
      %1030 = vmatpush1.msra.mxu0 0.0
      %1031 = vmatprep.subr.mxu0 0.0
      %1032 = vmatpush1.msra.mxu0 0.0
      %1033 = vmatprep.subr.mxu0 0.0
      %1034 = vmatpush1.msra.mxu0 0.0
      %1035 = vmatprep.subr.mxu0 0.0
      %1036 = vmatpush1.msra.mxu0 0.0
      %1037 = vmatprep.subr.mxu0 0.0
      %1038 = vmatpush1.msra.mxu0 0.0
      %1039 = vmatprep.subr.mxu0 0.0
      %1040 = vmatpush1.msra.mxu0 0.0
      %1041 = vmatprep.subr.mxu0 0.0
      %1042 = vmatpush1.msra.mxu0 0.0
      %1043 = vmatprep.subr.mxu0 0.0
      %1044 = vmatpush1.msra.mxu0 0.0
      %1045 = vmatprep.subr.mxu0 0.0
      %1046 = vmatpush1.msra.mxu0 0.0
      %1047 = vmatprep.subr.mxu0 0.0
      %1048 = vmatpush1.msra.mxu0 0.0
      %1049 = vmatprep.subr.mxu0 0.0
      %1050 = vmatpush1.msra.mxu0 0.0
      %1051 = vmatprep.mubr.f32.mxu0 0.0
      %1052 = vmatmul.mubr.f32.gmra.mrb[0].mxu0 %v979
      %v1053 = vpop.f32.mrb[0].mxu0
      %v1054 = vadd.f32 0.0, %v1053
      %v1055 = vpop.f32.mrb[0].mxu0
      %v1056 = vadd.f32 0.0, %v1055
      %1057 = vdwg.mxu0
      %v1058 = vadd.f32 %v955, %v1054
      %v1059 = vadd.f32 %v956, %v1056
      %1060 = vrot.lane.b32.xlu0 %v453, 113
      %v1061 = vpop.permute.xlu0 %1060
      %1062 = vrot.lane.b32.xlu0 %v454, 113
      %v1063 = vpop.permute.xlu0 %1062
      %vm1064 = vcmp.lt.s32.totalorder %v467, 113
      %v1065 = vsel %vm1064, %v1061, %v1063
      %v1066 = vsel %vm1064, %v1063, %v1061
      %vm1067 = vmand %vm459, %vm460
      %v1068 = vsel %vm1067, 1, 0
      %v1069 = vlaneseq
      %v1070 = vshrl.u32 %v1069, 7
      %v1071 = vsub.s32 0, %v1070
      %v1072 = vrot.slane %v1068, %v1071
      %v1073 = vlaneseq
      %v1074 = vshrl.u32 %v1073, 7
      %v1075 = vsub.s32 1, %v1074
      %v1076 = vrot.slane %v1068, %v1075
      %vm1077 = vcmp.eq.s32.totalorder %v1072, 1
      %vm1078 = vcmp.eq.s32.totalorder %v1076, 1
      %v1079 = vsel %vm1077, %v1065, 0.0
      %v1080 = vsel %vm1078, %v1066, 0.0
      %1081 = vrot.lane.b32.xlu0 %v485, 104
      %v1082 = vpop.permute.xlu0 %1081
      %v1083 = vsel %vm357, %v1082, 0
      %v1086 = vsel %vm361, %v1079, 0
      %v1089 = vsel %vm361, %v1080, 0
      %1091 = vmatprep.subr.mxu0 %v1089
      %1092 = vmatpush1.msra.mxu0 %v1086
      %1093 = vmatprep.subr.mxu0 0.0
      %1094 = vmatpush1.msra.mxu0 0.0
      %1095 = vmatprep.subr.mxu0 0.0
      %1096 = vmatpush1.msra.mxu0 0.0
      %1097 = vmatprep.subr.mxu0 0.0
      %1098 = vmatpush1.msra.mxu0 0.0
      %1099 = vmatprep.subr.mxu0 0.0
      %1100 = vmatpush1.msra.mxu0 0.0
      %1101 = vmatprep.subr.mxu0 0.0
      %1102 = vmatpush1.msra.mxu0 0.0
      %1103 = vmatprep.subr.mxu0 0.0
      %1104 = vmatpush1.msra.mxu0 0.0
      %1105 = vmatprep.subr.mxu0 0.0
      %1106 = vmatpush1.msra.mxu0 0.0
      %1107 = vmatprep.subr.mxu0 0.0
      %1108 = vmatpush1.msra.mxu0 0.0
      %1109 = vmatprep.subr.mxu0 0.0
      %1110 = vmatpush1.msra.mxu0 0.0
      %1111 = vmatprep.subr.mxu0 0.0
      %1112 = vmatpush1.msra.mxu0 0.0
      %1113 = vmatprep.subr.mxu0 0.0
      %1114 = vmatpush1.msra.mxu0 0.0
      %1115 = vmatprep.subr.mxu0 0.0
      %1116 = vmatpush1.msra.mxu0 0.0
      %1117 = vmatprep.subr.mxu0 0.0
      %1118 = vmatpush1.msra.mxu0 0.0
      %1119 = vmatprep.subr.mxu0 0.0
      %1120 = vmatpush1.msra.mxu0 0.0
      %1121 = vmatprep.subr.mxu0 0.0
      %1122 = vmatpush1.msra.mxu0 0.0
      %1123 = vmatprep.subr.mxu0 0.0
      %1124 = vmatpush1.msra.mxu0 0.0
      %1125 = vmatprep.subr.mxu0 0.0
      %1126 = vmatpush1.msra.mxu0 0.0
      %1127 = vmatprep.subr.mxu0 0.0
      %1128 = vmatpush1.msra.mxu0 0.0
      %1129 = vmatprep.subr.mxu0 0.0
      %1130 = vmatpush1.msra.mxu0 0.0
      %1131 = vmatprep.subr.mxu0 0.0
      %1132 = vmatpush1.msra.mxu0 0.0
      %1133 = vmatprep.subr.mxu0 0.0
      %1134 = vmatpush1.msra.mxu0 0.0
      %1135 = vmatprep.subr.mxu0 0.0
      %1136 = vmatpush1.msra.mxu0 0.0
      %1137 = vmatprep.subr.mxu0 0.0
      %1138 = vmatpush1.msra.mxu0 0.0
      %1139 = vmatprep.subr.mxu0 0.0
      %1140 = vmatpush1.msra.mxu0 0.0
      %1141 = vmatprep.subr.mxu0 0.0
      %1142 = vmatpush1.msra.mxu0 0.0
      %1143 = vmatprep.subr.mxu0 0.0
      %1144 = vmatpush1.msra.mxu0 0.0
      %1145 = vmatprep.subr.mxu0 0.0
      %1146 = vmatpush1.msra.mxu0 0.0
      %1147 = vmatprep.subr.mxu0 0.0
      %1148 = vmatpush1.msra.mxu0 0.0
      %1149 = vmatprep.subr.mxu0 0.0
      %1150 = vmatpush1.msra.mxu0 0.0
      %1151 = vmatprep.subr.mxu0 0.0
      %1152 = vmatpush1.msra.mxu0 0.0
      %1153 = vmatprep.subr.mxu0 0.0
      %1154 = vmatpush1.msra.mxu0 0.0
      %1155 = vmatprep.mubr.f32.mxu0 0.0
      %1156 = vmatmul.mubr.f32.gmra.mrb[0].mxu0 %v1083
      %v1157 = vpop.f32.mrb[0].mxu0
      %v1158 = vadd.f32 0.0, %v1157
      %v1159 = vpop.f32.mrb[0].mxu0
      %v1160 = vadd.f32 0.0, %v1159
      %1161 = vdwg.mxu0
      %v1162 = vadd.f32 %v1058, %v1158
      %v1163 = vadd.f32 %v1059, %v1160
      %1164 = vrot.lane.b32.xlu0 %v453, 112
      %v1165 = vpop.permute.xlu0 %1164
      %1166 = vrot.lane.b32.xlu0 %v454, 112
      %v1167 = vpop.permute.xlu0 %1166
      %vm1168 = vcmp.lt.s32.totalorder %v467, 112
      %v1169 = vsel %vm1168, %v1165, %v1167
      %v1170 = vsel %vm1168, %v1167, %v1165
      %v1171 = vsel %vm459, 1, 0
      %v1172 = vlaneseq
      %v1173 = vshrl.u32 %v1172, 7
      %v1174 = vsub.s32 0, %v1173
      %v1175 = vrot.slane %v1171, %v1174
      %v1176 = vlaneseq
      %v1177 = vshrl.u32 %v1176, 7
      %v1178 = vsub.s32 1, %v1177
      %v1179 = vrot.slane %v1171, %v1178
      %vm1180 = vcmp.eq.s32.totalorder %v1175, 1
      %vm1181 = vcmp.eq.s32.totalorder %v1179, 1
      %v1182 = vsel %vm1180, %v1169, 0.0
      %v1183 = vsel %vm1181, %v1170, 0.0
      %1184 = vrot.lane.b32.xlu0 %v485, 100
      %v1185 = vpop.permute.xlu0 %1184
      %v1186 = vsel %vm357, %v1185, 0
      %v1189 = vsel %vm361, %v1182, 0
      %v1192 = vsel %vm361, %v1183, 0
      %1194 = vmatprep.subr.mxu0 %v1192
      %1195 = vmatpush1.msra.mxu0 %v1189
      %1196 = vmatprep.subr.mxu0 0.0
      %1197 = vmatpush1.msra.mxu0 0.0
      %1198 = vmatprep.subr.mxu0 0.0
      %1199 = vmatpush1.msra.mxu0 0.0
      %1200 = vmatprep.subr.mxu0 0.0
      %1201 = vmatpush1.msra.mxu0 0.0
      %1202 = vmatprep.subr.mxu0 0.0
      %1203 = vmatpush1.msra.mxu0 0.0
      %1204 = vmatprep.subr.mxu0 0.0
      %1205 = vmatpush1.msra.mxu0 0.0
      %1206 = vmatprep.subr.mxu0 0.0
      %1207 = vmatpush1.msra.mxu0 0.0
      %1208 = vmatprep.subr.mxu0 0.0
      %1209 = vmatpush1.msra.mxu0 0.0
      %1210 = vmatprep.subr.mxu0 0.0
      %1211 = vmatpush1.msra.mxu0 0.0
      %1212 = vmatprep.subr.mxu0 0.0
      %1213 = vmatpush1.msra.mxu0 0.0
      %1214 = vmatprep.subr.mxu0 0.0
      %1215 = vmatpush1.msra.mxu0 0.0
      %1216 = vmatprep.subr.mxu0 0.0
      %1217 = vmatpush1.msra.mxu0 0.0
      %1218 = vmatprep.subr.mxu0 0.0
      %1219 = vmatpush1.msra.mxu0 0.0
      %1220 = vmatprep.subr.mxu0 0.0
      %1221 = vmatpush1.msra.mxu0 0.0
      %1222 = vmatprep.subr.mxu0 0.0
      %1223 = vmatpush1.msra.mxu0 0.0
      %1224 = vmatprep.subr.mxu0 0.0
      %1225 = vmatpush1.msra.mxu0 0.0
      %1226 = vmatprep.subr.mxu0 0.0
      %1227 = vmatpush1.msra.mxu0 0.0
      %1228 = vmatprep.subr.mxu0 0.0
      %1229 = vmatpush1.msra.mxu0 0.0
      %1230 = vmatprep.subr.mxu0 0.0
      %1231 = vmatpush1.msra.mxu0 0.0
      %1232 = vmatprep.subr.mxu0 0.0
      %1233 = vmatpush1.msra.mxu0 0.0
      %1234 = vmatprep.subr.mxu0 0.0
      %1235 = vmatpush1.msra.mxu0 0.0
      %1236 = vmatprep.subr.mxu0 0.0
      %1237 = vmatpush1.msra.mxu0 0.0
      %1238 = vmatprep.subr.mxu0 0.0
      %1239 = vmatpush1.msra.mxu0 0.0
      %1240 = vmatprep.subr.mxu0 0.0
      %1241 = vmatpush1.msra.mxu0 0.0
      %1242 = vmatprep.subr.mxu0 0.0
      %1243 = vmatpush1.msra.mxu0 0.0
      %1244 = vmatprep.subr.mxu0 0.0
      %1245 = vmatpush1.msra.mxu0 0.0
      %1246 = vmatprep.subr.mxu0 0.0
      %1247 = vmatpush1.msra.mxu0 0.0
      %1248 = vmatprep.subr.mxu0 0.0
      %1249 = vmatpush1.msra.mxu0 0.0
      %1250 = vmatprep.subr.mxu0 0.0
      %1251 = vmatpush1.msra.mxu0 0.0
      %1252 = vmatprep.subr.mxu0 0.0
      %1253 = vmatpush1.msra.mxu0 0.0
      %1254 = vmatprep.subr.mxu0 0.0
      %1255 = vmatpush1.msra.mxu0 0.0
      %1256 = vmatprep.subr.mxu0 0.0
      %1257 = vmatpush1.msra.mxu0 0.0
      %1258 = vmatprep.mubr.f32.mxu0 0.0
      %1259 = vmatmul.mubr.f32.gmra.mrb[0].mxu0 %v1186
      %v1260 = vpop.f32.mrb[0].mxu0
      %v1261 = vadd.f32 0.0, %v1260
      %v1262 = vpop.f32.mrb[0].mxu0
      %v1263 = vadd.f32 0.0, %v1262
      %1264 = vdwg.mxu0
      %v1265 = vadd.f32 %v1162, %v1261
      %v1266 = vadd.f32 %v1163, %v1263
      %1267 = vrot.lane.b32.xlu0 %v453, 111
      %v1268 = vpop.permute.xlu0 %1267
      %1269 = vrot.lane.b32.xlu0 %v454, 111
      %v1270 = vpop.permute.xlu0 %1269
      %vm1271 = vcmp.lt.s32.totalorder %v467, 111
      %v1272 = vsel %vm1271, %v1268, %v1270
      %v1273 = vsel %vm1271, %v1270, %v1268
      %vm1274 = vmand %vm459, %vm461
      %v1275 = vsel %vm1274, 1, 0
      %v1276 = vlaneseq
      %v1277 = vshrl.u32 %v1276, 7
      %v1278 = vsub.s32 0, %v1277
      %v1279 = vrot.slane %v1275, %v1278
      %v1280 = vlaneseq
      %v1281 = vshrl.u32 %v1280, 7
      %v1282 = vsub.s32 1, %v1281
      %v1283 = vrot.slane %v1275, %v1282
      %vm1284 = vcmp.eq.s32.totalorder %v1279, 1
      %vm1285 = vcmp.eq.s32.totalorder %v1283, 1
      %v1286 = vsel %vm1284, %v1272, 0.0
      %v1287 = vsel %vm1285, %v1273, 0.0
      %1288 = vrot.lane.b32.xlu0 %v485, 96
      %v1289 = vpop.permute.xlu0 %1288
      %v1290 = vsel %vm357, %v1289, 0
      %v1293 = vsel %vm361, %v1286, 0
      %v1296 = vsel %vm361, %v1287, 0
      %1298 = vmatprep.subr.mxu0 %v1296
      %1299 = vmatpush1.msra.mxu0 %v1293
      %1300 = vmatprep.subr.mxu0 0.0
      %1301 = vmatpush1.msra.mxu0 0.0
      %1302 = vmatprep.subr.mxu0 0.0
      %1303 = vmatpush1.msra.mxu0 0.0
      %1304 = vmatprep.subr.mxu0 0.0
      %1305 = vmatpush1.msra.mxu0 0.0
      %1306 = vmatprep.subr.mxu0 0.0
      %1307 = vmatpush1.msra.mxu0 0.0
      %1308 = vmatprep.subr.mxu0 0.0
      %1309 = vmatpush1.msra.mxu0 0.0
      %1310 = vmatprep.subr.mxu0 0.0
      %1311 = vmatpush1.msra.mxu0 0.0
      %1312 = vmatprep.subr.mxu0 0.0
      %1313 = vmatpush1.msra.mxu0 0.0
      %1314 = vmatprep.subr.mxu0 0.0
      %1315 = vmatpush1.msra.mxu0 0.0
      %1316 = vmatprep.subr.mxu0 0.0
      %1317 = vmatpush1.msra.mxu0 0.0
      %1318 = vmatprep.subr.mxu0 0.0
      %1319 = vmatpush1.msra.mxu0 0.0
      %1320 = vmatprep.subr.mxu0 0.0
      %1321 = vmatpush1.msra.mxu0 0.0
      %1322 = vmatprep.subr.mxu0 0.0
      %1323 = vmatpush1.msra.mxu0 0.0
      %1324 = vmatprep.subr.mxu0 0.0
      %1325 = vmatpush1.msra.mxu0 0.0
      %1326 = vmatprep.subr.mxu0 0.0
      %1327 = vmatpush1.msra.mxu0 0.0
      %1328 = vmatprep.subr.mxu0 0.0
      %1329 = vmatpush1.msra.mxu0 0.0
      %1330 = vmatprep.subr.mxu0 0.0
      %1331 = vmatpush1.msra.mxu0 0.0
      %1332 = vmatprep.subr.mxu0 0.0
      %1333 = vmatpush1.msra.mxu0 0.0
      %1334 = vmatprep.subr.mxu0 0.0
      %1335 = vmatpush1.msra.mxu0 0.0
      %1336 = vmatprep.subr.mxu0 0.0
      %1337 = vmatpush1.msra.mxu0 0.0
      %1338 = vmatprep.subr.mxu0 0.0
      %1339 = vmatpush1.msra.mxu0 0.0
      %1340 = vmatprep.subr.mxu0 0.0
      %1341 = vmatpush1.msra.mxu0 0.0
      %1342 = vmatprep.subr.mxu0 0.0
      %1343 = vmatpush1.msra.mxu0 0.0
      %1344 = vmatprep.subr.mxu0 0.0
      %1345 = vmatpush1.msra.mxu0 0.0
      %1346 = vmatprep.subr.mxu0 0.0
      %1347 = vmatpush1.msra.mxu0 0.0
      %1348 = vmatprep.subr.mxu0 0.0
      %1349 = vmatpush1.msra.mxu0 0.0
      %1350 = vmatprep.subr.mxu0 0.0
      %1351 = vmatpush1.msra.mxu0 0.0
      %1352 = vmatprep.subr.mxu0 0.0
      %1353 = vmatpush1.msra.mxu0 0.0
      %1354 = vmatprep.subr.mxu0 0.0
      %1355 = vmatpush1.msra.mxu0 0.0
      %1356 = vmatprep.subr.mxu0 0.0
      %1357 = vmatpush1.msra.mxu0 0.0
      %1358 = vmatprep.subr.mxu0 0.0
      %1359 = vmatpush1.msra.mxu0 0.0
      %1360 = vmatprep.subr.mxu0 0.0
      %1361 = vmatpush1.msra.mxu0 0.0
      %1362 = vmatprep.mubr.f32.mxu0 0.0
      %1363 = vmatmul.mubr.f32.gmra.mrb[0].mxu0 %v1290
      %v1364 = vpop.f32.mrb[0].mxu0
      %v1365 = vadd.f32 0.0, %v1364
      %v1366 = vpop.f32.mrb[0].mxu0
      %v1367 = vadd.f32 0.0, %v1366
      %1368 = vdwg.mxu0
      %v1369 = vadd.f32 %v1265, %v1365
      %v1370 = vadd.f32 %v1266, %v1367
      %v1371 = vld [vmem:[%s7] sm:$0xff]
      %1373 = vset.pattern.permute.xlu0 0
      %1374 = vperm.xlu0 %1373, %v1371
      %v1375 = vpop.permute.xlu0 %1374
      %v1377 = vadd.f32 %v1369, %v1375
      %v1378 = vadd.f32 %v1370, %v1375
      %1379 = vst [vmem:[%s341] sm:$0xff] %v1377
      %1380 = vst [vmem:[%s341 + $0x8] sm:$0xff] %v1378
      %1381 = vmatprep.subr.mxu0 0.0
      %1382 = vmatpush1.msra.mxu0 1.0
      %1383 = vmatprep.subr.mxu0 0.0
      %1384 = vmatpush1.msra.mxu0 1.0
      %1385 = vmatprep.subr.mxu0 0.0
      %1386 = vmatpush1.msra.mxu0 1.0
      %1387 = vmatprep.subr.mxu0 0.0
      %1388 = vmatpush1.msra.mxu0 1.0
      %1389 = vmatprep.subr.mxu0 0.0
      %1390 = vmatpush1.msra.mxu0 1.0
      %1391 = vmatprep.subr.mxu0 0.0
      %1392 = vmatpush1.msra.mxu0 1.0
      %1393 = vmatprep.subr.mxu0 0.0
      %1394 = vmatpush1.msra.mxu0 1.0
      %1395 = vmatprep.subr.mxu0 0.0
      %1396 = vmatpush1.msra.mxu0 1.0
      %1397 = vmatprep.subr.mxu0 0.0
      %1398 = vmatpush1.msra.mxu0 1.0
      %1399 = vmatprep.subr.mxu0 0.0
      %1400 = vmatpush1.msra.mxu0 1.0
      %1401 = vmatprep.subr.mxu0 0.0
      %1402 = vmatpush1.msra.mxu0 1.0
      %1403 = vmatprep.subr.mxu0 0.0
      %1404 = vmatpush1.msra.mxu0 1.0
      %1405 = vmatprep.subr.mxu0 0.0
      %1406 = vmatpush1.msra.mxu0 1.0
      %1407 = vmatprep.subr.mxu0 0.0
      %1408 = vmatpush1.msra.mxu0 1.0
      %1409 = vmatprep.subr.mxu0 0.0
      %1410 = vmatpush1.msra.mxu0 1.0
      %1411 = vmatprep.subr.mxu0 0.0
      %1412 = vmatpush1.msra.mxu0 1.0
      %1413 = vmatprep.subr.mxu0 0.0
      %1414 = vmatpush1.msra.mxu0 1.0
      %1415 = vmatprep.subr.mxu0 0.0
      %1416 = vmatpush1.msra.mxu0 1.0
      %1417 = vmatprep.subr.mxu0 0.0
      %1418 = vmatpush1.msra.mxu0 1.0
      %1419 = vmatprep.subr.mxu0 0.0
      %1420 = vmatpush1.msra.mxu0 1.0
      %1421 = vmatprep.subr.mxu0 0.0
      %1422 = vmatpush1.msra.mxu0 1.0
      %1423 = vmatprep.subr.mxu0 0.0
      %1424 = vmatpush1.msra.mxu0 1.0
      %1425 = vmatprep.subr.mxu0 0.0
      %1426 = vmatpush1.msra.mxu0 1.0
      %1427 = vmatprep.subr.mxu0 0.0
      %1428 = vmatpush1.msra.mxu0 1.0
      %1429 = vmatprep.subr.mxu0 0.0
      %1430 = vmatpush1.msra.mxu0 1.0
      %1431 = vmatprep.subr.mxu0 0.0
      %1432 = vmatpush1.msra.mxu0 1.0
      %1433 = vmatprep.subr.mxu0 0.0
      %1434 = vmatpush1.msra.mxu0 1.0
      %1435 = vmatprep.subr.mxu0 0.0
      %1436 = vmatpush1.msra.mxu0 1.0
      %1437 = vmatprep.subr.mxu0 0.0
      %1438 = vmatpush1.msra.mxu0 1.0
      %1439 = vmatprep.subr.mxu0 0.0
      %1440 = vmatpush1.msra.mxu0 1.0
      %1441 = vmatprep.subr.mxu0 0.0
      %1442 = vmatpush1.msra.mxu0 1.0
      %1443 = vmatprep.subr.mxu0 0.0
      %1444 = vmatpush1.msra.mxu0 1.0
      %1445 = vmatprep.mubr.f32.mxu0 %v1378
      %1446 = vmatmul.mubr.f32.gmra.mrb[0].mxu0 %v1377
      %v1447 = vpop.f32.mrb[0].mxu0
      %v1448 = vadd.f32 0.0, %v1447
      %v1449 = vpop.f32.mrb[0].mxu0
      %1450 = vdwg.mxu0
      %v1451 = vmul.f32 %v1377, %v1377
      %v1452 = vmul.f32 %v1378, %v1378
      %1453 = vmatprep.subr.mxu0 0.0
      %1454 = vmatpush1.msra.mxu0 1.0
      %1455 = vmatprep.subr.mxu0 0.0
      %1456 = vmatpush1.msra.mxu0 1.0
      %1457 = vmatprep.subr.mxu0 0.0
      %1458 = vmatpush1.msra.mxu0 1.0
      %1459 = vmatprep.subr.mxu0 0.0
      %1460 = vmatpush1.msra.mxu0 1.0
      %1461 = vmatprep.subr.mxu0 0.0
      %1462 = vmatpush1.msra.mxu0 1.0
      %1463 = vmatprep.subr.mxu0 0.0
      %1464 = vmatpush1.msra.mxu0 1.0
      %1465 = vmatprep.subr.mxu0 0.0
      %1466 = vmatpush1.msra.mxu0 1.0
      %1467 = vmatprep.subr.mxu0 0.0
      %1468 = vmatpush1.msra.mxu0 1.0
      %1469 = vmatprep.subr.mxu0 0.0
      %1470 = vmatpush1.msra.mxu0 1.0
      %1471 = vmatprep.subr.mxu0 0.0
      %1472 = vmatpush1.msra.mxu0 1.0
      %1473 = vmatprep.subr.mxu0 0.0
      %1474 = vmatpush1.msra.mxu0 1.0
      %1475 = vmatprep.subr.mxu0 0.0
      %1476 = vmatpush1.msra.mxu0 1.0
      %1477 = vmatprep.subr.mxu0 0.0
      %1478 = vmatpush1.msra.mxu0 1.0
      %1479 = vmatprep.subr.mxu0 0.0
      %1480 = vmatpush1.msra.mxu0 1.0
      %1481 = vmatprep.subr.mxu0 0.0
      %1482 = vmatpush1.msra.mxu0 1.0
      %1483 = vmatprep.subr.mxu0 0.0
      %1484 = vmatpush1.msra.mxu0 1.0
      %1485 = vmatprep.subr.mxu0 0.0
      %1486 = vmatpush1.msra.mxu0 1.0
      %1487 = vmatprep.subr.mxu0 0.0
      %1488 = vmatpush1.msra.mxu0 1.0
      %1489 = vmatprep.subr.mxu0 0.0
      %1490 = vmatpush1.msra.mxu0 1.0
      %1491 = vmatprep.subr.mxu0 0.0
      %1492 = vmatpush1.msra.mxu0 1.0
      %1493 = vmatprep.subr.mxu0 0.0
      %1494 = vmatpush1.msra.mxu0 1.0
      %1495 = vmatprep.subr.mxu0 0.0
      %1496 = vmatpush1.msra.mxu0 1.0
      %1497 = vmatprep.subr.mxu0 0.0
      %1498 = vmatpush1.msra.mxu0 1.0
      %1499 = vmatprep.subr.mxu0 0.0
      %1500 = vmatpush1.msra.mxu0 1.0
      %1501 = vmatprep.subr.mxu0 0.0
      %1502 = vmatpush1.msra.mxu0 1.0
      %1503 = vmatprep.subr.mxu0 0.0
      %1504 = vmatpush1.msra.mxu0 1.0
      %1505 = vmatprep.subr.mxu0 0.0
      %1506 = vmatpush1.msra.mxu0 1.0
      %1507 = vmatprep.subr.mxu0 0.0
      %1508 = vmatpush1.msra.mxu0 1.0
      %1509 = vmatprep.subr.mxu0 0.0
      %1510 = vmatpush1.msra.mxu0 1.0
      %1511 = vmatprep.subr.mxu0 0.0
      %1512 = vmatpush1.msra.mxu0 1.0
      %1513 = vmatprep.subr.mxu0 0.0
      %1514 = vmatpush1.msra.mxu0 1.0
      %1515 = vmatprep.subr.mxu0 0.0
      %1516 = vmatpush1.msra.mxu0 1.0
      %1517 = vmatprep.mubr.f32.mxu0 %v1452
      %1518 = vmatmul.mubr.f32.gmra.mrb[0].mxu0 %v1451
      %v1519 = vpop.f32.mrb[0].mxu0
      %v1520 = vadd.f32 0.0, %v1519
      %v1521 = vpop.f32.mrb[0].mxu0
      %1522 = vdwg.mxu0
      %vm1523 = vcmask 7168
      %1524 = vst.msk [vmem:[%s346] sm:$0xff] %vm1523, %v1448
      %1526 = vrot.lane.b32.xlu0 %v1520, 1
      %v1527 = vpop.permute.xlu0 %1526
      %vm1529 = vcmask 15368
      %1530 = vst.msk [vmem:[%s346] sm:$0xff] %vm1529, %v1527
      %s1531 = smul.u32 2, %s21
      %p1532 = scmp.lt.s32.totalorder %s1531, 3
      %s1533 = scalar_select %p1532, %s1531, 3
      %s1534 = smul.addr %s1533, 8
      %s1535 = scalar_lea.vmem %s8, %s1534
      %p1536 = scmp.lt.s32.totalorder %s21, 1
      %s1537 = scalar_select %p1536, %s21, 1
      %s1538 = smul.addr %s1537, 8
      %s1539 = scalar_lea.vmem %s9, %s1538
      // Predicated region
      $region53: #{shuffle_unit_forward.4} parent=51 // pred_check
        %p1540 = pneg %p212
      $region54: #{shuffle_unit_forward.4} parent=51 // pred_check_branch
        %1542 = sbr.rel (%p1540) target = $region56
      $region55: #{shuffle_unit_forward.4} parent=51 // pred_region
        %s1543 = smul.u32 2, %s21
      $region56: #{shuffle_unit_forward.4} parent=51 // pred_fallthru
        _
      // Predicated region
      $region57: #{shuffle_unit_forward.4} parent=51 // pred_check
        %p1544 = pneg %p238
      $region58: #{shuffle_unit_forward.4} parent=51 // pred_check_branch
        %1546 = sbr.rel (%p1544) target = $region60
      $region59: #{shuffle_unit_forward.4} parent=51 // pred_region
        _
      $region60: #{shuffle_unit_forward.4} parent=51 // pred_fallthru
        _
    $region52: #{shuffle_unit_forward.4} parent=5 // pred_fallthru
      _
    %p1547 = scmp.le.s32.totalorder 2, %s16
    // Predicated region
    $region61: #{shuffle_unit_forward.4} parent=5 // pred_check
      %p1548 = pneg %p1547
    $region62: #{shuffle_unit_forward.4} parent=5 // pred_check_branch
      %1550 = sbr.rel (%p1548) target = $region64
    $region63: #{shuffle_unit_forward.4} parent=5 // pred_region
      %s1551 = ssub.s32 %s16, 2
      // Predicated region
      $region65: #{shuffle_unit_forward.4} parent=63 // pred_check
        %p1552 = pneg %p218
      $region66: #{shuffle_unit_forward.4} parent=63 // pred_check_branch
        %1554 = sbr.rel (%p1552) target = $region68
      $region67: #{shuffle_unit_forward.4} parent=63 // pred_region
        %s1555 = smul.u32 2, %s22
        %p1556 = scmp.lt.s32.totalorder %s1555, 3
        %s1557 = scalar_select %p1556, %s1555, 3
        %s1558 = smul.addr %s1557, 8
        %s1559 = scalar_lea.vmem %s8, %s1558
      $region68: #{shuffle_unit_forward.4} parent=63 // pred_fallthru
        _
      // Predicated region
      $region69: #{shuffle_unit_forward.4} parent=63 // pred_check
        %p1560 = pneg %p244
      $region70: #{shuffle_unit_forward.4} parent=63 // pred_check_branch
        %1562 = sbr.rel (%p1560) target = $region72
      $region71: #{shuffle_unit_forward.4} parent=63 // pred_region
        %p1563 = scmp.lt.s32.totalorder %s22, 1
        %s1564 = scalar_select %p1563, %s22, 1
        %s1565 = smul.addr %s1564, 8
        %s1566 = scalar_lea.vmem %s9, %s1565
      $region72: #{shuffle_unit_forward.4} parent=63 // pred_fallthru
        _
    $region64: #{shuffle_unit_forward.4} parent=5 // pred_fallthru
      _
  $region6: #{shuffle_unit_forward.4} parent=0 // loop_footer
    %s20 = sadd.s32 1, %s16
  $region7: #{shuffle_unit_forward.4} parent=0 // loop_footer_branch
    %15 = sbr.rel target = $region3
  $region8: #{shuffle_unit_forward.4} parent=0 // loop_exit
    _

</llo_original>
